<compile_context>
chip_gen: v6e
topology: v6e:2x2x1
jax: 0.10.0
libtpu: 0.0.40
codegen_flags: <defaults>
</compile_context>

<pallas_src>
import math

import jax
import jax.numpy as jnp
from jax import lax
from jax.experimental import pallas as pl
from jax.experimental.pallas import tpu as pltpu


# --------------------------- small helpers ---------------------------

def _round_up(n, m):
    return ((n + m - 1) // m) * m


def _largest_divisor(n, cap):
    """Largest divisor of n that is <= cap (cap clamped to >= 1)."""
    t = max(1, min(n, cap))
    while n % t:
        t -= 1
    return t


def _is_concrete(a):
    """True if `a` is a concrete (non-tracer) jax.Array -- safe to cache."""
    try:
        return isinstance(a, jax.Array) and not isinstance(a, jax.core.Tracer)
    except Exception:
        return False


_VMEM_TILE_BUDGET = 40 * 1024 * 1024   # double-buffered working-set target (v7x-safe)
_VMEM_LIMIT_BYTES = 48 * 1024 * 1024   # scoped VMEM limit; < v7x's 64 MiB physical


# --------------------------- Pallas kernel ---------------------------

def _make_spectral_kernel(B_t, Ci, Co_t, M_t, ci_unroll, needs_cast, guard_w, fancy):
    """Build the per-grid-step kernel body.

    x*_ref : (B_t, Ci,  M_t)  activation tile (real / imag), operand dtype
    w*_ref : (Ci, Co_t, M_t)  weight tile     (real / imag), operand dtype
    o*_ref : (B_t, Co_t, M_t) output tile     (real / imag), float32

    Weights are per-mode, so this can never be an MXU matmul -- it is a pure
    VPU multiply-accumulate.  Ci is reduced with small in-register f32
    accumulators of shape (Co_t, M_t), kept at <= 16 vregs.

    fancy=True : fori over the batch tile, stride-0 broadcast loads (when
                 Co_t <= Ci) and, for bf16 operands, a single weight->f32
                 VMEM-scratch conversion per grid step.
    fancy=False: conservative variant (static b loop, per-row casts) used as an
                 automatic fallback if the tuned variant fails to lower.
    """
    use_bcast_load = Co_t <= Ci   # stride-0 slice length must not exceed the Ci axis

    def _load_x_row(x_ref, b, i):
        if use_bcast_load:
            # Stride-0 sublane-broadcast load: row i replicated over Co_t
            # sublanes directly in the load slot (no VALU broadcast needed).
            return x_ref[b, pl.ds(i, Co_t, stride=0), :].astype(jnp.float32)
        return x_ref[b, pl.ds(i, 1), :].astype(jnp.float32)          # (1, M_t)

    def _body(xr_ref, xi_ref, wr, wi, or_ref, oi_ref):
        # wr / wi are always float32 refs here (either the operands themselves
        # or the converted VMEM scratch) -> no per-row cast inside the loops.
        def b_body(b, carry):
            def ci_body(i, acc):
                ar, ai = acc
                xr = _load_x_row(xr_ref, b, i)
                xi = _load_x_row(xi_ref, b, i)
                wr_i = wr[i]                                          # (Co_t, M_t)
                wi_i = wi[i]
                # (a + ib)(c + id) = (ac - bd) + i(ad + bc)
                ar = ar + (xr * wr_i - xi * wi_i)
                ai = ai + (xr * wi_i + xi * wr_i)
                return ar, ai

            zeros = jnp.zeros((Co_t, M_t), jnp.float32)
            acc_r, acc_i = lax.fori_loop(0, Ci, ci_body, (zeros, zeros),
                                         unroll=ci_unroll)
            or_ref[b] = acc_r
            oi_ref[b] = acc_i
            return carry

        lax.fori_loop(0, B_t, b_body, 0)

    if not fancy:
        def kernel(xr_ref, xi_ref, wr_ref, wi_ref, or_ref, oi_ref):
            for b in range(B_t):                      # small static batch tile
                def ci_body(i, acc, b=b):
                    ar, ai = acc
                    xr = xr_ref[b, pl.ds(i, 1), :].astype(jnp.float32)
                    xi = xi_ref[b, pl.ds(i, 1), :].astype(jnp.float32)
                    wr_i = wr_ref[i].astype(jnp.float32)
                    wi_i = wi_ref[i].astype(jnp.float32)
                    ar = ar + (xr * wr_i - xi * wi_i)
                    ai = ai + (xr * wi_i + xi * wr_i)
                    return ar, ai

                zeros = jnp.zeros((Co_t, M_t), jnp.float32)
                acc_r, acc_i = lax.fori_loop(0, Ci, ci_body, (zeros, zeros),
                                             unroll=ci_unroll)
                or_ref[b, :, :] = acc_r
                oi_ref[b, :, :] = acc_i
        return kernel

    if needs_cast:
        def kernel(xr_ref, xi_ref, wr_ref, wi_ref, or_ref, oi_ref, wr_sc, wi_sc):
            def _convert():
                wr_sc[...] = wr_ref[...].astype(jnp.float32)
                wi_sc[...] = wi_ref[...].astype(jnp.float32)
            if guard_w:
                # Weight block is resident across the innermost grid axis ->
                # convert only when it (re)arrives.  That axis is marked
                # "arbitrary" in this case so the guard is sequentially valid.
                pl.when(pl.program_id(2) == 0)(_convert)
            else:
                _convert()
            _body(xr_ref, xi_ref, wr_sc, wi_sc, or_ref, oi_ref)
        return kernel

    def kernel(xr_ref, xi_ref, wr_ref, wi_ref, or_ref, oi_ref):
        _body(xr_ref, xi_ref, wr_ref, wi_ref, or_ref, oi_ref)
    return kernel


# --------------------------- tiling / wrapper ---------------------------

def _choose_tiles(B, Ci, Cop, Mp, op_bytes, needs_cast):
    """Pick (B_t, Co_t, M_t).  Co_t * M_t <= 8192 keeps the two f32 accumulators
    at <= 16 vregs; the double-buffered tile set must fit the VMEM budget."""
    n128 = Mp // 128
    B_t = _largest_divisor(B, 8)   # TODO(synk): prime batch sizes degrade to B_t=1.
    co_cands = [c for c in (32, 16, 8) if Cop % c == 0] or [Cop]
    for Co_t in co_cands:
        cap = max(1, min(8192 // Co_t, 1024) // 128)
        d = _largest_divisor(n128, cap)
        while True:
            M_t = 128 * d
            tile = (2 * B_t * Ci + 2 * Ci * Co_t) * M_t * op_bytes \
                   + 2 * B_t * Co_t * M_t * 4
            scratch = 2 * Ci * Co_t * M_t * 4 if needs_cast else 0
            if 2 * tile + scratch <= _VMEM_TILE_BUDGET:
                return B_t, Co_t, M_t
            if d == 1:
                break
            d = _largest_divisor(n128, d - 1)
    return 1, co_cands[-1], 128       # last resort: minimal tiles


def prepare_spectral_weights(wr, wi, operand_dtype=jnp.float32):
    """One-time weight prep: pad C_out to a multiple of 8 and M to a multiple of
    128 (lane-dense, (8,128)-friendly blocks) and cast to the operand dtype.
    Do this once per layer and cache it; only x-side prep runs per forward."""
    op_dtype = jnp.dtype(operand_dtype)
    Ci, Co, M = wr.shape
    Cop, Mp = _round_up(Co, 8), _round_up(M, 128)
    if (Cop, Mp) != (Co, M):
        pad = ((0, 0), (0, Cop - Co), (0, Mp - M))
        wr, wi = jnp.pad(wr, pad), jnp.pad(wi, pad)
    if wr.dtype != op_dtype:
        wr, wi = wr.astype(op_dtype), wi.astype(op_dtype)
    return wr, wi


def spectral_contract(xr, xi, wr, wi, *, operand_dtype=jnp.float32):
    """out[b,o,m] = sum_i x[b,i,m] * w[i,o,m]  (complex, real/imag split).

    xr, xi : (B, Ci, M); wr, wi : (Ci, Co, M), raw or `prepare_spectral_weights`-ed.
    Returns two (B, Co, M) float32 arrays with Co = wr.shape[1] as passed.

    operand_dtype: jnp.bfloat16 on v6e/v7x halves the operand HBM streams
    (accumulation is always float32); keep float32 on v5e (no bf16 VALU there).
    """
    op_dtype = jnp.dtype(operand_dtype)
    needs_cast = op_dtype != jnp.dtype(jnp.float32)
    op_bytes = op_dtype.itemsize

    B, Ci, M = xr.shape
    Ci_w, Co_w, M_w = wr.shape
    Mp = _round_up(M, 128)
    if Ci_w != Ci or M_w not in (M, Mp):
        raise ValueError(f"weight shape {wr.shape} incompatible with x {xr.shape}")

    # Weights: pad/cast only if the caller did not pre-prepare (and cache) them.
    if M_w != Mp or Co_w % 8 != 0 or wr.dtype != op_dtype:
        wr, wi = prepare_spectral_weights(wr, wi, op_dtype)
    Cop = wr.shape[1]

    # x: cast + pad the mode axis only to the next multiple of 128 (lane tile).
    if xr.dtype != op_dtype:
        xr, xi = xr.astype(op_dtype), xi.astype(op_dtype)
    if Mp != M:
        pad = ((0, 0), (0, 0), (0, Mp - M))
        xr, xi = jnp.pad(xr, pad), jnp.pad(xi, pad)

    B_t, Co_t, M_t = _choose_tiles(B, Ci, Cop, Mp, op_bytes, needs_cast)
    n_m, n_c, n_b = Mp // M_t, Cop // Co_t, B // B_t

    # A (1,1,1) grid leaves the second TensorCore idle on v7x: split the mode
    # axis if possible, else the batch axis.
    if n_m == 1 and n_c == 1 and n_b == 1:
        if Mp // 128 >= 2:
            M_t = 128 * _largest_divisor(Mp // 128, max(1, (Mp // 128) // 2))
            n_m = Mp // M_t
        elif B >= 2:
            B_t = _largest_divisor(B, max(1, B // 2))
            n_b = B // B_t

    # Grid order: keep resident whichever operand would otherwise be re-streamed
    # the most from HBM (x is re-read n_c times if b is innermost, w is re-read
    # n_b times if c is innermost).
    x_restream = B * Ci * (n_c - 1)
    w_restream = Ci * Cop * (n_b - 1)
    b_inner = x_restream <= w_restream

    if b_inner:
        grid = (n_m, n_c, n_b)
        x_spec = pl.BlockSpec((B_t, Ci, M_t), lambda m, c, b: (b, 0, m))
        w_spec = pl.BlockSpec((Ci, Co_t, M_t), lambda m, c, b: (0, c, m))
        o_spec = pl.BlockSpec((B_t, Co_t, M_t), lambda m, c, b: (b, c, m))
    else:
        grid = (n_m, n_b, n_c)
        x_spec = pl.BlockSpec((B_t, Ci, M_t), lambda m, b, c: (b, 0, m))
        w_spec = pl.BlockSpec((Ci, Co_t, M_t), lambda m, b, c: (0, c, m))
        o_spec = pl.BlockSpec((B_t, Co_t, M_t), lambda m, b, c: (b, c, m))

    if Ci <= 4:
        ci_unroll = True
    elif Co_t * M_t >= 8192:
        ci_unroll = 2
    else:
        ci_unroll = 4

    out_shape = (jax.ShapeDtypeStruct((B, Cop, Mp), jnp.float32),
                 jax.ShapeDtypeStruct((B, Cop, Mp), jnp.float32))

    def _run(fancy):
        guard_w = fancy and needs_cast and b_inner and n_b > 1
        kernel = _make_spectral_kernel(B_t, Ci, Co_t, M_t, ci_unroll,
                                       needs_cast, guard_w, fancy)
        scratch = ([pltpu.VMEM((Ci, Co_t, M_t), jnp.float32)] * 2
                   if (fancy and needs_cast) else [])
        inner_sem = "arbitrary" if guard_w else "parallel"
        out = pl.pallas_call(
            kernel,
            out_shape=out_shape,
            grid_spec=pltpu.PrefetchScalarGridSpec(
                num_scalar_prefetch=0,
                grid=grid,
                in_specs=[x_spec, x_spec, w_spec, w_spec],
                out_specs=(o_spec, o_spec),
                scratch_shapes=scratch),
            compiler_params=pltpu.CompilerParams(
                dimension_semantics=("parallel", "parallel", inner_sem),
                vmem_limit_bytes=_VMEM_LIMIT_BYTES),
        )(xr, xi, wr, wi)
        return jax.block_until_ready(out)

    try:
        or_, oi_ = _run(fancy=True)
    except Exception:
        # Conservative fallback kernel if the tuned variant fails to lower/run
        # (only effective when called eagerly; under jit the tuned path is used).
        or_, oi_ = _run(fancy=False)

    return or_[:, :Co_w, :M], oi_[:, :Co_w, :M]


# --------------------------- Module port ---------------------------

class SpectralConvJAX:
    """JAX port of SpectralConv (ComplexDense factorization = dense complex weight)."""

    def __init__(self, in_channels, out_channels, n_modes, max_n_modes=None,
                 bias=True, n_layers=1, init_std="auto", fft_norm="backward",
                 operand_dtype=jnp.float32, key=None):
        self.in_channels = in_channels
        self.out_channels = out_channels
        self.operand_dtype = jnp.dtype(operand_dtype)   # bf16 recommended on v6e/v7x

        # n_modes setter semantics: last dim -> n // 2 + 1 (rFFT redundancy)
        if isinstance(n_modes, int):
            n_modes = [n_modes]
        n_modes = list(n_modes)
        n_modes[-1] = n_modes[-1] // 2 + 1
        self.n_modes = n_modes
        self.order = len(n_modes)

        if max_n_modes is None:
            max_n_modes = list(self.n_modes)
        elif isinstance(max_n_modes, int):
            max_n_modes = [max_n_modes]
        self.max_n_modes = max_n_modes

        self.n_layers = n_layers
        self.fft_norm = fft_norm

        if init_std == "auto":
            init_std = (2.0 / (in_channels + out_channels)) ** 0.5

        if key is None:
            key = jax.random.PRNGKey(0)
        kwr, kwi, kb = jax.random.split(key, 3)

        weight_shape = (n_layers, in_channels, out_channels, *self.max_n_modes)
        self.weight_r = init_std * jax.random.normal(kwr, weight_shape, dtype=jnp.float32)
        self.weight_i = init_std * jax.random.normal(kwi, weight_shape, dtype=jnp.float32)

        if bias:
            bias_shape = (n_layers, out_channels) + (1,) * self.order
            self.bias = init_std * jax.random.normal(kb, bias_shape, dtype=jnp.float32)
        else:
            self.bias = None

        # Per-(layer, fft_size) cache of prepared kernel weights: weights are
        # static across forwards, so slice/reshape/pad/cast runs only once.
        self._w_cache = {}

    # --- cached weight preparation (slice -> flatten -> pad -> cast) ---
    def _prepared(self, indices, fft_size):
        key = (int(indices), tuple(int(s) for s in fft_size))
        hit = self._w_cache.get(key)
        if hit is not None:
            return hit

        wr = self.weight_r[indices]
        wi = self.weight_i[indices]
        starts = [max_m - min(size, n_m)
                  for size, n_m, max_m in zip(fft_size, self.n_modes, self.max_n_modes)]
        sl_w = [slice(None), slice(None)]
        sl_w += [slice(s // 2, -s // 2) if s else slice(None) for s in starts[:-1]]
        sl_w += [slice(None, -starts[-1]) if starts[-1] else slice(None)]
        wr, wi = wr[tuple(sl_w)], wi[tuple(sl_w)]
        kept = tuple(wr.shape[2:])
        M = int(math.prod(kept))
        wr = wr.reshape(self.in_channels, self.out_channels, M)
        wi = wi.reshape(self.in_channels, self.out_channels, M)
        wr_p, wi_p = prepare_spectral_weights(wr, wi, self.operand_dtype)

        hit = (wr_p, wi_p, kept)
        if _is_concrete(wr_p):        # do not cache tracers if __call__ is jitted
            self._w_cache[key] = hit
        return hit

    def __call__(self, x, indices=0, output_shape=None):
        B = x.shape[0]
        mode_sizes = list(x.shape[2:])
        fft_size = list(mode_sizes)
        fft_size[-1] = fft_size[-1] // 2 + 1
        fft_dims = tuple(range(-self.order, 0))

        # TODO(synk): rfftn/irfftn/fftshift have no Pallas primitive; FFTs stay in jnp.fft.
        xf = jnp.fft.rfftn(x, axes=fft_dims, norm=self.fft_norm)
        if self.order > 1:
            xf = jnp.fft.fftshift(xf, axes=fft_dims[:-1])

        wr_p, wi_p, kept = self._prepared(indices, fft_size)

        # --- activation slicing (kept modes, centred like the reference) ---
        starts = [size - min(size, k) for size, k in zip(list(xf.shape[2:]), kept)]
        sl_x = [slice(None), slice(None)]
        sl_x += [slice(s // 2, -s // 2) if s else slice(None) for s in starts[:-1]]
        sl_x += [slice(None, -starts[-1]) if starts[-1] else slice(None)]
        xs = xf[tuple(sl_x)]                     # (B, Cin, *kept) complex64

        M = int(math.prod(kept))
        # TODO(synk): fuse the complex->real/imag de-interleave into the kernel DMA
        # (bitcast + strided load) to save one wrapper-side HBM pass over x.
        xr = jnp.real(xs).reshape(B, self.in_channels, M)
        xi = jnp.imag(xs).reshape(B, self.in_channels, M)

        # --- Pallas kernel: tiled complex per-mode channel contraction ---
        or_, oi_ = spectral_contract(xr, xi, wr_p, wi_p,
                                     operand_dtype=self.operand_dtype)
        or_ = or_[:, :self.out_channels]
        oi_ = oi_[:, :self.out_channels]
        out = (or_ + 1j * oi_).reshape(B, self.out_channels, *kept).astype(jnp.complex64)

        out_fft = jnp.zeros((B, self.out_channels, *fft_size), dtype=jnp.complex64)
        out_fft = out_fft.at[tuple(sl_x)].set(out)

        if output_shape is not None:
            mode_sizes = list(output_shape)
        if self.order > 1:
            out_fft = jnp.fft.fftshift(out_fft, axes=fft_dims[:-1])
        y = jnp.fft.irfftn(out_fft, s=tuple(mode_sizes), axes=fft_dims, norm=self.fft_norm)

        if self.bias is not None:
            y = y + self.bias[indices]
        return y


class SubConvJAX:
    """Port of `SubConv`: a view onto one layer of the mother joint conv."""

    def __init__(self, main_conv, indices):
        self.main_conv = main_conv
        self.indices = indices

    def __call__(self, x, **kwargs):
        return self.main_conv(x, self.indices, **kwargs)

    def transform(self, x, **kwargs):
        # TODO(synk): resolution transform (spectral resampling) not ported; identity here.
        return x

    @property
    def weight(self):
        return (self.main_conv.weight_r[self.indices],
                self.main_conv.weight_i[self.indices])


# --------------------------- reference & test ---------------------------

def _reference_forward(conv: SpectralConvJAX, x, indices=0):
    """Pure-JAX reference (einsum instead of the Pallas kernel) for a sanity check."""
    B, _, *mode_sizes = x.shape
    fft_size = list(mode_sizes)
    fft_size[-1] = fft_size[-1] // 2 + 1
    fft_dims = tuple(range(-conv.order, 0))
    xf = jnp.fft.rfftn(x, axes=fft_dims, norm=conv.fft_norm)
    if conv.order > 1:
        xf = jnp.fft.fftshift(xf, axes=fft_dims[:-1])
    w = conv.weight_r[indices] + 1j * conv.weight_i[indices]
    starts = [max_m - min(size, n_m)
              for size, n_m, max_m in zip(fft_size, conv.n_modes, conv.max_n_modes)]
    sl_w = [slice(None), slice(None)]
    sl_w += [slice(s // 2, -s // 2) if s else slice(s, None) for s in starts[:-1]]
    sl_w += [slice(None, -starts[-1]) if starts[-1] else slice(None)]
    w = w[tuple(sl_w)]
    starts = [size - min(size, n_m) for size, n_m in zip(list(xf.shape[2:]), list(w.shape[2:]))]
    sl_x = [slice(None), slice(None)]
    sl_x += [slice(s // 2, -s // 2) if s else slice(s, None) for s in starts[:-1]]
    sl_x += [slice(None, -starts[-1]) if starts[-1] else slice(None)]
    xs = xf[tuple(sl_x)]
    contracted = jnp.einsum("abcd,becd->aecd", xs, w)
    out_fft = jnp.zeros((B, conv.out_channels, *fft_size), dtype=jnp.complex64)
    out_fft = out_fft.at[tuple(sl_x)].set(contracted)
    if conv.order > 1:
        out_fft = jnp.fft.fftshift(out_fft, axes=fft_dims[:-1])
    y = jnp.fft.irfftn(out_fft, s=tuple(mode_sizes), axes=fft_dims, norm=conv.fft_norm)
    if conv.bias is not None:
        y = y + conv.bias[indices]
    return y


if __name__ == "__main__":
    key = jax.random.PRNGKey(0)
    kx1, kx2, kp1, kp2 = jax.random.split(key, 4)

    # --- case 1: float32 operands (safe default on every TPU generation) ---
    B, C_in, C_out, H, W = 2, 4, 4, 16, 16
    x = jax.random.normal(kx1, (B, C_in, H, W), dtype=jnp.float32)
    main_conv = SpectralConvJAX(C_in, C_out, n_modes=(8, 8), bias=True,
                                n_layers=1, key=kp1)
    sub = SubConvJAX(main_conv, indices=0)

    y = jax.block_until_ready(sub(x))              # Pallas kernel path
    assert y.shape == (B, C_out, H, W), y.shape
    y_ref = jax.block_until_ready(_reference_forward(main_conv, x, indices=0))
    assert jnp.allclose(y, y_ref, rtol=1e-3, atol=1e-3), float(jnp.abs(y - y_ref).max())
    y_again = jax.block_until_ready(sub(x))        # exercises the cached-weight path
    assert jnp.allclose(y_again, y_ref, rtol=1e-3, atol=1e-3)

    # --- case 2: bf16 operands (v6e/v7x HBM saver), looser tolerance ---
    B2, Ci2, Co2, H2, W2 = 2, 8, 48, 32, 32
    xb = jax.random.normal(kx2, (B2, Ci2, H2, W2), dtype=jnp.float32)
    conv_bf16 = SpectralConvJAX(Ci2, Co2, n_modes=(16, 16), bias=True, n_layers=1,
                                operand_dtype=jnp.bfloat16, key=kp2)
    sub_bf16 = SubConvJAX(conv_bf16, indices=0)
    yb = jax.block_until_ready(sub_bf16(xb))
    yb_ref = jax.block_until_ready(_reference_forward(conv_bf16, xb, indices=0))
    rel = float(jnp.max(jnp.abs(yb - yb_ref)) / (jnp.max(jnp.abs(yb_ref)) + 1e-12))
    assert yb.shape == (B2, Co2, H2, W2) and rel < 5e-2, rel

    print("KERNEL_OK")
</pallas_src>

<mosaic_0001>
module attributes {stable_mosaic.version = 11 : i64} {
  func.func @kernel(%arg0: i32, %arg1: i32, %arg2: i32, %arg3: memref<1x4x128xf32, #tpu.memory_space<vmem>>, %arg4: memref<1x4x128xf32, #tpu.memory_space<vmem>>, %arg5: memref<4x8x128xf32, #tpu.memory_space<vmem>>, %arg6: memref<4x8x128xf32, #tpu.memory_space<vmem>>, %arg7: memref<1x8x128xf32, #tpu.memory_space<vmem>>, %arg8: memref<1x8x128xf32, #tpu.memory_space<vmem>>) attributes {dimension_semantics = [#tpu.dimension_semantics<parallel>, #tpu.dimension_semantics<parallel>, #tpu.dimension_semantics<parallel>], iteration_bounds = array<i64: 1, 1, 2>, scalar_prefetch = 0 : i64, scratch_operands = 0 : i64, tpu.core_type = #tpu.core_type<tc>, window_params = [{transform_indices = @transform_0, window_bounds = array<i64: 1, 4, 128>}, {transform_indices = @transform_1, window_bounds = array<i64: 1, 4, 128>}, {transform_indices = @transform_2, window_bounds = array<i64: 4, 8, 128>}, {transform_indices = @transform_3, window_bounds = array<i64: 4, 8, 128>}, {transform_indices = @transform_4, window_bounds = array<i64: 1, 8, 128>}, {transform_indices = @transform_5, window_bounds = array<i64: 1, 8, 128>}]} {
    %c0_i32 = arith.constant 0 : i32
    %cst = arith.constant 0.000000e+00 : f32
    %0 = vector.broadcast %cst : f32 to vector<8x128xf32>
    %c0_i32_0 = arith.constant 0 : i32
    %1 = arith.index_cast %c0_i32 : i32 to index
    %2 = arith.index_cast %c0_i32_0 : i32 to index
    %c0 = arith.constant 0 : index
    %3 = vector.load %arg3[%1, %2, %c0] : memref<1x4x128xf32, #tpu.memory_space<vmem>>, vector<1x1x128xf32>
    %4 = vector.shape_cast %3 : vector<1x1x128xf32> to vector<1x128xf32>
    %5 = arith.index_cast %c0_i32 : i32 to index
    %6 = arith.index_cast %c0_i32_0 : i32 to index
    %c0_1 = arith.constant 0 : index
    %7 = vector.load %arg4[%5, %6, %c0_1] : memref<1x4x128xf32, #tpu.memory_space<vmem>>, vector<1x1x128xf32>
    %8 = vector.shape_cast %7 : vector<1x1x128xf32> to vector<1x128xf32>
    %9 = arith.index_cast %c0_i32_0 : i32 to index
    %c0_2 = arith.constant 0 : index
    %c0_3 = arith.constant 0 : index
    %10 = vector.load %arg5[%9, %c0_2, %c0_3] : memref<4x8x128xf32, #tpu.memory_space<vmem>>, vector<1x8x128xf32>
    %11 = vector.shape_cast %10 : vector<1x8x128xf32> to vector<8x128xf32>
    %12 = arith.index_cast %c0_i32_0 : i32 to index
    %c0_4 = arith.constant 0 : index
    %c0_5 = arith.constant 0 : index
    %13 = vector.load %arg6[%12, %c0_4, %c0_5] : memref<4x8x128xf32, #tpu.memory_space<vmem>>, vector<1x8x128xf32>
    %14 = vector.shape_cast %13 : vector<1x8x128xf32> to vector<8x128xf32>
    %15 = vector.broadcast %4 : vector<1x128xf32> to vector<8x128xf32>
    %16 = arith.mulf %15, %11 : vector<8x128xf32>
    %17 = vector.broadcast %8 : vector<1x128xf32> to vector<8x128xf32>
    %18 = arith.mulf %17, %14 : vector<8x128xf32>
    %19 = arith.subf %16, %18 : vector<8x128xf32>
    %20 = arith.addf %0, %19 : vector<8x128xf32>
    %21 = vector.broadcast %4 : vector<1x128xf32> to vector<8x128xf32>
    %22 = arith.mulf %21, %14 : vector<8x128xf32>
    %23 = vector.broadcast %8 : vector<1x128xf32> to vector<8x128xf32>
    %24 = arith.mulf %23, %11 : vector<8x128xf32>
    %25 = arith.addf %22, %24 : vector<8x128xf32>
    %26 = arith.addf %0, %25 : vector<8x128xf32>
    %c1_i32 = arith.constant 1 : i32
    %27 = arith.index_cast %c0_i32 : i32 to index
    %28 = arith.index_cast %c1_i32 : i32 to index
    %c0_6 = arith.constant 0 : index
    %29 = vector.load %arg3[%27, %28, %c0_6] : memref<1x4x128xf32, #tpu.memory_space<vmem>>, vector<1x1x128xf32>
    %30 = vector.shape_cast %29 : vector<1x1x128xf32> to vector<1x128xf32>
    %31 = arith.index_cast %c0_i32 : i32 to index
    %32 = arith.index_cast %c1_i32 : i32 to index
    %c0_7 = arith.constant 0 : index
    %33 = vector.load %arg4[%31, %32, %c0_7] : memref<1x4x128xf32, #tpu.memory_space<vmem>>, vector<1x1x128xf32>
    %34 = vector.shape_cast %33 : vector<1x1x128xf32> to vector<1x128xf32>
    %35 = arith.index_cast %c1_i32 : i32 to index
    %c0_8 = arith.constant 0 : index
    %c0_9 = arith.constant 0 : index
    %36 = vector.load %arg5[%35, %c0_8, %c0_9] : memref<4x8x128xf32, #tpu.memory_space<vmem>>, vector<1x8x128xf32>
    %37 = vector.shape_cast %36 : vector<1x8x128xf32> to vector<8x128xf32>
    %38 = arith.index_cast %c1_i32 : i32 to index
    %c0_10 = arith.constant 0 : index
    %c0_11 = arith.constant 0 : index
    %39 = vector.load %arg6[%38, %c0_10, %c0_11] : memref<4x8x128xf32, #tpu.memory_space<vmem>>, vector<1x8x128xf32>
    %40 = vector.shape_cast %39 : vector<1x8x128xf32> to vector<8x128xf32>
    %41 = vector.broadcast %30 : vector<1x128xf32> to vector<8x128xf32>
    %42 = arith.mulf %41, %37 : vector<8x128xf32>
    %43 = vector.broadcast %34 : vector<1x128xf32> to vector<8x128xf32>
    %44 = arith.mulf %43, %40 : vector<8x128xf32>
    %45 = arith.subf %42, %44 : vector<8x128xf32>
    %46 = arith.addf %20, %45 : vector<8x128xf32>
    %47 = vector.broadcast %30 : vector<1x128xf32> to vector<8x128xf32>
    %48 = arith.mulf %47, %40 : vector<8x128xf32>
    %49 = vector.broadcast %34 : vector<1x128xf32> to vector<8x128xf32>
    %50 = arith.mulf %49, %37 : vector<8x128xf32>
    %51 = arith.addf %48, %50 : vector<8x128xf32>
    %52 = arith.addf %26, %51 : vector<8x128xf32>
    %c2_i32 = arith.constant 2 : i32
    %53 = arith.index_cast %c0_i32 : i32 to index
    %54 = arith.index_cast %c2_i32 : i32 to index
    %c0_12 = arith.constant 0 : index
    %55 = vector.load %arg3[%53, %54, %c0_12] : memref<1x4x128xf32, #tpu.memory_space<vmem>>, vector<1x1x128xf32>
    %56 = vector.shape_cast %55 : vector<1x1x128xf32> to vector<1x128xf32>
    %57 = arith.index_cast %c0_i32 : i32 to index
    %58 = arith.index_cast %c2_i32 : i32 to index
    %c0_13 = arith.constant 0 : index
    %59 = vector.load %arg4[%57, %58, %c0_13] : memref<1x4x128xf32, #tpu.memory_space<vmem>>, vector<1x1x128xf32>
    %60 = vector.shape_cast %59 : vector<1x1x128xf32> to vector<1x128xf32>
    %61 = arith.index_cast %c2_i32 : i32 to index
    %c0_14 = arith.constant 0 : index
    %c0_15 = arith.constant 0 : index
    %62 = vector.load %arg5[%61, %c0_14, %c0_15] : memref<4x8x128xf32, #tpu.memory_space<vmem>>, vector<1x8x128xf32>
    %63 = vector.shape_cast %62 : vector<1x8x128xf32> to vector<8x128xf32>
    %64 = arith.index_cast %c2_i32 : i32 to index
    %c0_16 = arith.constant 0 : index
    %c0_17 = arith.constant 0 : index
    %65 = vector.load %arg6[%64, %c0_16, %c0_17] : memref<4x8x128xf32, #tpu.memory_space<vmem>>, vector<1x8x128xf32>
    %66 = vector.shape_cast %65 : vector<1x8x128xf32> to vector<8x128xf32>
    %67 = vector.broadcast %56 : vector<1x128xf32> to vector<8x128xf32>
    %68 = arith.mulf %67, %63 : vector<8x128xf32>
    %69 = vector.broadcast %60 : vector<1x128xf32> to vector<8x128xf32>
    %70 = arith.mulf %69, %66 : vector<8x128xf32>
    %71 = arith.subf %68, %70 : vector<8x128xf32>
    %72 = arith.addf %46, %71 : vector<8x128xf32>
    %73 = vector.broadcast %56 : vector<1x128xf32> to vector<8x128xf32>
    %74 = arith.mulf %73, %66 : vector<8x128xf32>
    %75 = vector.broadcast %60 : vector<1x128xf32> to vector<8x128xf32>
    %76 = arith.mulf %75, %63 : vector<8x128xf32>
    %77 = arith.addf %74, %76 : vector<8x128xf32>
    %78 = arith.addf %52, %77 : vector<8x128xf32>
    %c3_i32 = arith.constant 3 : i32
    %79 = arith.index_cast %c0_i32 : i32 to index
    %80 = arith.index_cast %c3_i32 : i32 to index
    %c0_18 = arith.constant 0 : index
    %81 = vector.load %arg3[%79, %80, %c0_18] : memref<1x4x128xf32, #tpu.memory_space<vmem>>, vector<1x1x128xf32>
    %82 = vector.shape_cast %81 : vector<1x1x128xf32> to vector<1x128xf32>
    %83 = arith.index_cast %c0_i32 : i32 to index
    %84 = arith.index_cast %c3_i32 : i32 to index
    %c0_19 = arith.constant 0 : index
    %85 = vector.load %arg4[%83, %84, %c0_19] : memref<1x4x128xf32, #tpu.memory_space<vmem>>, vector<1x1x128xf32>
    %86 = vector.shape_cast %85 : vector<1x1x128xf32> to vector<1x128xf32>
    %87 = arith.index_cast %c3_i32 : i32 to index
    %c0_20 = arith.constant 0 : index
    %c0_21 = arith.constant 0 : index
    %88 = vector.load %arg5[%87, %c0_20, %c0_21] : memref<4x8x128xf32, #tpu.memory_space<vmem>>, vector<1x8x128xf32>
    %89 = vector.shape_cast %88 : vector<1x8x128xf32> to vector<8x128xf32>
    %90 = arith.index_cast %c3_i32 : i32 to index
    %c0_22 = arith.constant 0 : index
    %c0_23 = arith.constant 0 : index
    %91 = vector.load %arg6[%90, %c0_22, %c0_23] : memref<4x8x128xf32, #tpu.memory_space<vmem>>, vector<1x8x128xf32>
    %92 = vector.shape_cast %91 : vector<1x8x128xf32> to vector<8x128xf32>
    %93 = vector.broadcast %82 : vector<1x128xf32> to vector<8x128xf32>
    %94 = arith.mulf %93, %89 : vector<8x128xf32>
    %95 = vector.broadcast %86 : vector<1x128xf32> to vector<8x128xf32>
    %96 = arith.mulf %95, %92 : vector<8x128xf32>
    %97 = arith.subf %94, %96 : vector<8x128xf32>
    %98 = arith.addf %72, %97 : vector<8x128xf32>
    %99 = vector.broadcast %82 : vector<1x128xf32> to vector<8x128xf32>
    %100 = arith.mulf %99, %92 : vector<8x128xf32>
    %101 = vector.broadcast %86 : vector<1x128xf32> to vector<8x128xf32>
    %102 = arith.mulf %101, %89 : vector<8x128xf32>
    %103 = arith.addf %100, %102 : vector<8x128xf32>
    %104 = arith.addf %78, %103 : vector<8x128xf32>
    %c4_i32 = arith.constant 4 : i32
    %105 = arith.index_cast %c0_i32 : i32 to index
    %c0_24 = arith.constant 0 : index
    %c0_25 = arith.constant 0 : index
    %106 = vector.load %arg7[%105, %c0_24, %c0_25] : memref<1x8x128xf32, #tpu.memory_space<vmem>>, vector<1x8x128xf32>
    %107 = vector.shape_cast %106 : vector<1x8x128xf32> to vector<8x128xf32>
    %108 = vector.shape_cast %98 : vector<8x128xf32> to vector<1x8x128xf32>
    tpu.vector_store %arg7[%105, %c0_24, %c0_25], %108 {strides = array<i32>} : memref<1x8x128xf32, #tpu.memory_space<vmem>>, vector<1x8x128xf32>,
    %109 = arith.index_cast %c0_i32 : i32 to index
    %c0_26 = arith.constant 0 : index
    %c0_27 = arith.constant 0 : index
    %110 = vector.load %arg8[%109, %c0_26, %c0_27] : memref<1x8x128xf32, #tpu.memory_space<vmem>>, vector<1x8x128xf32>
    %111 = vector.shape_cast %110 : vector<1x8x128xf32> to vector<8x128xf32>
    %112 = vector.shape_cast %104 : vector<8x128xf32> to vector<1x8x128xf32>
    tpu.vector_store %arg8[%109, %c0_26, %c0_27], %112 {strides = array<i32>} : memref<1x8x128xf32, #tpu.memory_space<vmem>>, vector<1x8x128xf32>,
    %c1_i32_28 = arith.constant 1 : i32
    return
  }
  func.func @transform_0(%arg0: i32, %arg1: i32, %arg2: i32) -> (i32, i32, i32) {
    %c0_i32 = arith.constant 0 : i32
    %c0_i32_0 = arith.constant 0 : i32
    return %arg2, %c0_i32, %arg0 : i32, i32, i32
  }
  func.func @transform_1(%arg0: i32, %arg1: i32, %arg2: i32) -> (i32, i32, i32) {
    %c0_i32 = arith.constant 0 : i32
    %c0_i32_0 = arith.constant 0 : i32
    return %arg2, %c0_i32, %arg0 : i32, i32, i32
  }
  func.func @transform_2(%arg0: i32, %arg1: i32, %arg2: i32) -> (i32, i32, i32) {
    %c0_i32 = arith.constant 0 : i32
    %c0_i32_0 = arith.constant 0 : i32
    return %c0_i32, %arg1, %arg0 : i32, i32, i32
  }
  func.func @transform_3(%arg0: i32, %arg1: i32, %arg2: i32) -> (i32, i32, i32) {
    %c0_i32 = arith.constant 0 : i32
    %c0_i32_0 = arith.constant 0 : i32
    return %c0_i32, %arg1, %arg0 : i32, i32, i32
  }
  func.func @transform_4(%arg0: i32, %arg1: i32, %arg2: i32) -> (i32, i32, i32) {
    %c0_i32 = arith.constant 0 : i32
    return %arg2, %arg1, %arg0 : i32, i32, i32
  }
  func.func @transform_5(%arg0: i32, %arg1: i32, %arg2: i32) -> (i32, i32, i32) {
    %c0_i32 = arith.constant 0 : i32
    return %arg2, %arg1, %arg0 : i32, i32, i32
  }
}

module attributes {stable_mosaic.version = 11 : i64} {
  func.func @kernel(%arg0: i32, %arg1: i32, %arg2: i32, %arg3: memref<1x4x128xf32, #tpu.memory_space<vmem>>, %arg4: memref<1x4x128xf32, #tpu.memory_space<vmem>>, %arg5: memref<4x8x128xf32, #tpu.memory_space<vmem>>, %arg6: memref<4x8x128xf32, #tpu.memory_space<vmem>>, %arg7: memref<1x8x128xf32, #tpu.memory_space<vmem>>, %arg8: memref<1x8x128xf32, #tpu.memory_space<vmem>>) attributes {dimension_semantics = [#tpu.dimension_semantics<parallel>, #tpu.dimension_semantics<parallel>, #tpu.dimension_semantics<parallel>], iteration_bounds = array<i64: 1, 1, 2>, scalar_prefetch = 0 : i64, scratch_operands = 0 : i64, tpu.core_type = #tpu.core_type<tc>, window_params = [{transform_indices = @transform_0, window_bounds = array<i64: 1, 4, 128>}, {transform_indices = @transform_1, window_bounds = array<i64: 1, 4, 128>}, {transform_indices = @transform_2, window_bounds = array<i64: 4, 8, 128>}, {transform_indices = @transform_3, window_bounds = array<i64: 4, 8, 128>}, {transform_indices = @transform_4, window_bounds = array<i64: 1, 8, 128>}, {transform_indices = @transform_5, window_bounds = array<i64: 1, 8, 128>}]} {
    %cst = arith.constant 0.000000e+00 : f32
    %0 = vector.broadcast %cst : f32 to vector<8x128xf32>
    %c0_i32 = arith.constant 0 : i32
    %c0 = arith.constant 0 : index
    %1 = arith.index_cast %c0_i32 : i32 to index
    %c0_0 = arith.constant 0 : index
    %2 = vector.load %arg3[%c0, %1, %c0_0] : memref<1x4x128xf32, #tpu.memory_space<vmem>>, vector<1x1x128xf32>
    %3 = vector.shape_cast %2 : vector<1x1x128xf32> to vector<1x128xf32>
    %c0_1 = arith.constant 0 : index
    %4 = arith.index_cast %c0_i32 : i32 to index
    %c0_2 = arith.constant 0 : index
    %5 = vector.load %arg4[%c0_1, %4, %c0_2] : memref<1x4x128xf32, #tpu.memory_space<vmem>>, vector<1x1x128xf32>
    %6 = vector.shape_cast %5 : vector<1x1x128xf32> to vector<1x128xf32>
    %7 = arith.index_cast %c0_i32 : i32 to index
    %c0_3 = arith.constant 0 : index
    %c0_4 = arith.constant 0 : index
    %8 = vector.load %arg5[%7, %c0_3, %c0_4] : memref<4x8x128xf32, #tpu.memory_space<vmem>>, vector<1x8x128xf32>
    %9 = vector.shape_cast %8 : vector<1x8x128xf32> to vector<8x128xf32>
    %10 = arith.index_cast %c0_i32 : i32 to index
    %c0_5 = arith.constant 0 : index
    %c0_6 = arith.constant 0 : index
    %11 = vector.load %arg6[%10, %c0_5, %c0_6] : memref<4x8x128xf32, #tpu.memory_space<vmem>>, vector<1x8x128xf32>
    %12 = vector.shape_cast %11 : vector<1x8x128xf32> to vector<8x128xf32>
    %13 = vector.broadcast %3 : vector<1x128xf32> to vector<8x128xf32>
    %14 = arith.mulf %13, %9 : vector<8x128xf32>
    %15 = vector.broadcast %6 : vector<1x128xf32> to vector<8x128xf32>
    %16 = arith.mulf %15, %12 : vector<8x128xf32>
    %17 = arith.subf %14, %16 : vector<8x128xf32>
    %18 = arith.addf %0, %17 : vector<8x128xf32>
    %19 = vector.broadcast %3 : vector<1x128xf32> to vector<8x128xf32>
    %20 = arith.mulf %19, %12 : vector<8x128xf32>
    %21 = vector.broadcast %6 : vector<1x128xf32> to vector<8x128xf32>
    %22 = arith.mulf %21, %9 : vector<8x128xf32>
    %23 = arith.addf %20, %22 : vector<8x128xf32>
    %24 = arith.addf %0, %23 : vector<8x128xf32>
    %c1_i32 = arith.constant 1 : i32
    %c0_7 = arith.constant 0 : index
    %25 = arith.index_cast %c1_i32 : i32 to index
    %c0_8 = arith.constant 0 : index
    %26 = vector.load %arg3[%c0_7, %25, %c0_8] : memref<1x4x128xf32, #tpu.memory_space<vmem>>, vector<1x1x128xf32>
    %27 = vector.shape_cast %26 : vector<1x1x128xf32> to vector<1x128xf32>
    %c0_9 = arith.constant 0 : index
    %28 = arith.index_cast %c1_i32 : i32 to index
    %c0_10 = arith.constant 0 : index
    %29 = vector.load %arg4[%c0_9, %28, %c0_10] : memref<1x4x128xf32, #tpu.memory_space<vmem>>, vector<1x1x128xf32>
    %30 = vector.shape_cast %29 : vector<1x1x128xf32> to vector<1x128xf32>
    %31 = arith.index_cast %c1_i32 : i32 to index
    %c0_11 = arith.constant 0 : index
    %c0_12 = arith.constant 0 : index
    %32 = vector.load %arg5[%31, %c0_11, %c0_12] : memref<4x8x128xf32, #tpu.memory_space<vmem>>, vector<1x8x128xf32>
    %33 = vector.shape_cast %32 : vector<1x8x128xf32> to vector<8x128xf32>
    %34 = arith.index_cast %c1_i32 : i32 to index
    %c0_13 = arith.constant 0 : index
    %c0_14 = arith.constant 0 : index
    %35 = vector.load %arg6[%34, %c0_13, %c0_14] : memref<4x8x128xf32, #tpu.memory_space<vmem>>, vector<1x8x128xf32>
    %36 = vector.shape_cast %35 : vector<1x8x128xf32> to vector<8x128xf32>
    %37 = vector.broadcast %27 : vector<1x128xf32> to vector<8x128xf32>
    %38 = arith.mulf %37, %33 : vector<8x128xf32>
    %39 = vector.broadcast %30 : vector<1x128xf32> to vector<8x128xf32>
    %40 = arith.mulf %39, %36 : vector<8x128xf32>
    %41 = arith.subf %38, %40 : vector<8x128xf32>
    %42 = arith.addf %18, %41 : vector<8x128xf32>
    %43 = vector.broadcast %27 : vector<1x128xf32> to vector<8x128xf32>
    %44 = arith.mulf %43, %36 : vector<8x128xf32>
    %45 = vector.broadcast %30 : vector<1x128xf32> to vector<8x128xf32>
    %46 = arith.mulf %45, %33 : vector<8x128xf32>
    %47 = arith.addf %44, %46 : vector<8x128xf32>
    %48 = arith.addf %24, %47 : vector<8x128xf32>
    %c2_i32 = arith.constant 2 : i32
    %c0_15 = arith.constant 0 : index
    %49 = arith.index_cast %c2_i32 : i32 to index
    %c0_16 = arith.constant 0 : index
    %50 = vector.load %arg3[%c0_15, %49, %c0_16] : memref<1x4x128xf32, #tpu.memory_space<vmem>>, vector<1x1x128xf32>
    %51 = vector.shape_cast %50 : vector<1x1x128xf32> to vector<1x128xf32>
    %c0_17 = arith.constant 0 : index
    %52 = arith.index_cast %c2_i32 : i32 to index
    %c0_18 = arith.constant 0 : index
    %53 = vector.load %arg4[%c0_17, %52, %c0_18] : memref<1x4x128xf32, #tpu.memory_space<vmem>>, vector<1x1x128xf32>
    %54 = vector.shape_cast %53 : vector<1x1x128xf32> to vector<1x128xf32>
    %55 = arith.index_cast %c2_i32 : i32 to index
    %c0_19 = arith.constant 0 : index
    %c0_20 = arith.constant 0 : index
    %56 = vector.load %arg5[%55, %c0_19, %c0_20] : memref<4x8x128xf32, #tpu.memory_space<vmem>>, vector<1x8x128xf32>
    %57 = vector.shape_cast %56 : vector<1x8x128xf32> to vector<8x128xf32>
    %58 = arith.index_cast %c2_i32 : i32 to index
    %c0_21 = arith.constant 0 : index
    %c0_22 = arith.constant 0 : index
    %59 = vector.load %arg6[%58, %c0_21, %c0_22] : memref<4x8x128xf32, #tpu.memory_space<vmem>>, vector<1x8x128xf32>
    %60 = vector.shape_cast %59 : vector<1x8x128xf32> to vector<8x128xf32>
    %61 = vector.broadcast %51 : vector<1x128xf32> to vector<8x128xf32>
    %62 = arith.mulf %61, %57 : vector<8x128xf32>
    %63 = vector.broadcast %54 : vector<1x128xf32> to vector<8x128xf32>
    %64 = arith.mulf %63, %60 : vector<8x128xf32>
    %65 = arith.subf %62, %64 : vector<8x128xf32>
    %66 = arith.addf %42, %65 : vector<8x128xf32>
    %67 = vector.broadcast %51 : vector<1x128xf32> to vector<8x128xf32>
    %68 = arith.mulf %67, %60 : vector<8x128xf32>
    %69 = vector.broadcast %54 : vector<1x128xf32> to vector<8x128xf32>
    %70 = arith.mulf %69, %57 : vector<8x128xf32>
    %71 = arith.addf %68, %70 : vector<8x128xf32>
    %72 = arith.addf %48, %71 : vector<8x128xf32>
    %c3_i32 = arith.constant 3 : i32
    %c0_23 = arith.constant 0 : index
    %73 = arith.index_cast %c3_i32 : i32 to index
    %c0_24 = arith.constant 0 : index
    %74 = vector.load %arg3[%c0_23, %73, %c0_24] : memref<1x4x128xf32, #tpu.memory_space<vmem>>, vector<1x1x128xf32>
    %75 = vector.shape_cast %74 : vector<1x1x128xf32> to vector<1x128xf32>
    %c0_25 = arith.constant 0 : index
    %76 = arith.index_cast %c3_i32 : i32 to index
    %c0_26 = arith.constant 0 : index
    %77 = vector.load %arg4[%c0_25, %76, %c0_26] : memref<1x4x128xf32, #tpu.memory_space<vmem>>, vector<1x1x128xf32>
    %78 = vector.shape_cast %77 : vector<1x1x128xf32> to vector<1x128xf32>
    %79 = arith.index_cast %c3_i32 : i32 to index
    %c0_27 = arith.constant 0 : index
    %c0_28 = arith.constant 0 : index
    %80 = vector.load %arg5[%79, %c0_27, %c0_28] : memref<4x8x128xf32, #tpu.memory_space<vmem>>, vector<1x8x128xf32>
    %81 = vector.shape_cast %80 : vector<1x8x128xf32> to vector<8x128xf32>
    %82 = arith.index_cast %c3_i32 : i32 to index
    %c0_29 = arith.constant 0 : index
    %c0_30 = arith.constant 0 : index
    %83 = vector.load %arg6[%82, %c0_29, %c0_30] : memref<4x8x128xf32, #tpu.memory_space<vmem>>, vector<1x8x128xf32>
    %84 = vector.shape_cast %83 : vector<1x8x128xf32> to vector<8x128xf32>
    %85 = vector.broadcast %75 : vector<1x128xf32> to vector<8x128xf32>
    %86 = arith.mulf %85, %81 : vector<8x128xf32>
    %87 = vector.broadcast %78 : vector<1x128xf32> to vector<8x128xf32>
    %88 = arith.mulf %87, %84 : vector<8x128xf32>
    %89 = arith.subf %86, %88 : vector<8x128xf32>
    %90 = arith.addf %66, %89 : vector<8x128xf32>
    %91 = vector.broadcast %75 : vector<1x128xf32> to vector<8x128xf32>
    %92 = arith.mulf %91, %84 : vector<8x128xf32>
    %93 = vector.broadcast %78 : vector<1x128xf32> to vector<8x128xf32>
    %94 = arith.mulf %93, %81 : vector<8x128xf32>
    %95 = arith.addf %92, %94 : vector<8x128xf32>
    %96 = arith.addf %72, %95 : vector<8x128xf32>
    %c4_i32 = arith.constant 4 : i32
    %c0_31 = arith.constant 0 : index
    %c0_32 = arith.constant 0 : index
    %c0_33 = arith.constant 0 : index
    %97 = vector.load %arg7[%c0_31, %c0_32, %c0_33] : memref<1x8x128xf32, #tpu.memory_space<vmem>>, vector<1x8x128xf32>
    %98 = vector.shape_cast %97 : vector<1x8x128xf32> to vector<8x128xf32>
    %99 = vector.shape_cast %90 : vector<8x128xf32> to vector<1x8x128xf32>
    tpu.vector_store %arg7[%c0_31, %c0_32, %c0_33], %99 {strides = array<i32>} : memref<1x8x128xf32, #tpu.memory_space<vmem>>, vector<1x8x128xf32>,
    %c0_34 = arith.constant 0 : index
    %c0_35 = arith.constant 0 : index
    %c0_36 = arith.constant 0 : index
    %100 = vector.load %arg8[%c0_34, %c0_35, %c0_36] : memref<1x8x128xf32, #tpu.memory_space<vmem>>, vector<1x8x128xf32>
    %101 = vector.shape_cast %100 : vector<1x8x128xf32> to vector<8x128xf32>
    %102 = vector.shape_cast %96 : vector<8x128xf32> to vector<1x8x128xf32>
    tpu.vector_store %arg8[%c0_34, %c0_35, %c0_36], %102 {strides = array<i32>} : memref<1x8x128xf32, #tpu.memory_space<vmem>>, vector<1x8x128xf32>,
    return
  }
  func.func @transform_0(%arg0: i32, %arg1: i32, %arg2: i32) -> (i32, i32, i32) {
    %c0_i32 = arith.constant 0 : i32
    %c0_i32_0 = arith.constant 0 : i32
    return %arg2, %c0_i32, %arg0 : i32, i32, i32
  }
  func.func @transform_1(%arg0: i32, %arg1: i32, %arg2: i32) -> (i32, i32, i32) {
    %c0_i32 = arith.constant 0 : i32
    %c0_i32_0 = arith.constant 0 : i32
    return %arg2, %c0_i32, %arg0 : i32, i32, i32
  }
  func.func @transform_2(%arg0: i32, %arg1: i32, %arg2: i32) -> (i32, i32, i32) {
    %c0_i32 = arith.constant 0 : i32
    %c0_i32_0 = arith.constant 0 : i32
    return %c0_i32, %arg1, %arg0 : i32, i32, i32
  }
  func.func @transform_3(%arg0: i32, %arg1: i32, %arg2: i32) -> (i32, i32, i32) {
    %c0_i32 = arith.constant 0 : i32
    %c0_i32_0 = arith.constant 0 : i32
    return %c0_i32, %arg1, %arg0 : i32, i32, i32
  }
  func.func @transform_4(%arg0: i32, %arg1: i32, %arg2: i32) -> (i32, i32, i32) {
    %c0_i32 = arith.constant 0 : i32
    return %arg2, %arg1, %arg0 : i32, i32, i32
  }
  func.func @transform_5(%arg0: i32, %arg1: i32, %arg2: i32) -> (i32, i32, i32) {
    %c0_i32 = arith.constant 0 : i32
    return %arg2, %arg1, %arg0 : i32, i32, i32
  }
}

</mosaic_0001>

<llo_original>
// kernel: tpu_custom_call.1
$region0: #{tpu_custom_call.1}
  #allocation0 [shape = 'u32[]', space=smem, size = 0x4, offset = 0x4, fixed_abs, tag = 'smem constant byte address 0x4 - core index']
  #allocation1 [shape = 'u32[144,128]{1,0:T(1,128)}', space=vmem, size = 0x12000, scoped, tag = 'internal scratch']
  %s0 = inlined_call_operand.hbm [shape: f32[2,4,128], index: 0, kind: input, shape index: {}]
  %s1 = inlined_call_operand.hbm [shape: f32[2,4,128], index: 1, kind: input, shape index: {}]
  %s2 = inlined_call_operand.hbm [shape: f32[4,8,128], index: 2, kind: input, shape index: {}]
  %s3 = inlined_call_operand.hbm [shape: f32[4,8,128], index: 3, kind: input, shape index: {}]
  %s4 = inlined_call_operand.hbm [shape: f32[2,8,128], index: 4, kind: output, shape index: {0}]
  %s5 = inlined_call_operand.hbm [shape: f32[2,8,128], index: 5, kind: output, shape index: {1}]
  %6 = xla_tuple %s4, %s5
  %s7 = sld [smem:[#allocation0]]
  $region73: #{tpu_custom_call.1} parent=0
    _
  %s9 = ssub.s32 1, %s7
  %s10 = scalar_select 0, %s9, %s7
  $region1: #{tpu_custom_call.1} parent=0
    #allocation2 [shape = 'u8[4096]{0}', space=vmem, size = 0x1000, scoped, tag = 'input window, operand 0']
    #allocation3 [shape = 's32[2]{0}', space=sflag, size = 0x8, scoped, tag = 'scoped memory for tpu_custom_call.1']
    #allocation4 [shape = 's32[2]{0}', space=sflag, size = 0x8, scoped, tag = 'scoped memory for tpu_custom_call.1']
    #allocation5 [shape = 'u8[4096]{0}', space=vmem, size = 0x1000, scoped, tag = 'input window, operand 1']
    #allocation6 [shape = 's32[2]{0}', space=sflag, size = 0x8, scoped, tag = 'scoped memory for tpu_custom_call.1']
    #allocation7 [shape = 'u8[16384]{0}', space=vmem, size = 0x4000, scoped, tag = 'input window, operand 2, single buffered']
    #allocation8 [shape = 'u8[16384]{0}', space=vmem, size = 0x4000, scoped, tag = 'input window, operand 3, single buffered']
    #allocation9 [shape = 's32[1]{0}', space=sflag, size = 0x4, scoped, tag = 'scoped memory for tpu_custom_call.1']
    #allocation10 [shape = 'u8[8192]{0}', space=vmem, size = 0x2000, scoped, tag = 'output window, operand 0']
    #allocation11 [shape = 'u8[8192]{0}', space=vmem, size = 0x2000, scoped, tag = 'output window, operand 1']
    #allocation12 [shape = 's32[2]{0}', space=sflag, size = 0x8, scoped, tag = 'scoped memory for tpu_custom_call.1']
    %11 = vsyncpa [#allocation3], 0
    %s12 = scalar_lea.sflag [#allocation3], 1
    %13 = vsyncpa %s12, 0
    %14 = vsyncpa [#allocation6], 0
    %s15 = scalar_lea.sflag [#allocation6], 1
    %16 = vsyncpa %s15, 0
    %17 = vsyncpa [#allocation9], 0
    %18 = vsyncpa [#allocation4], 0
    %s19 = scalar_lea.sflag [#allocation4], 1
    %20 = vsyncpa %s19, 0
    %21 = vsyncpa [#allocation12], 0
    %s22 = scalar_lea.sflag [#allocation12], 1
    %23 = vsyncpa %s22, 0
    loop: start=0, step=1, limit=4
    $region2: #{tpu_custom_call.1} parent=1 // loop_pre_header
      _
    $region3: #{tpu_custom_call.1} parent=1 // loop_header
      %s25 = sphi 0, %s29
      %p26 = scmp.ge.s32.totalorder %s25, 4
      %s32 = sphi 0, %s51
      %s33 = sphi 0, %s47
      %s34 = sphi 0, %s43
      %s35 = sphi 0, %s32
      %s36 = sphi 0, %s33
      %s37 = sphi 0, %s34
      %s38 = sphi 0, %s35
      %s39 = sphi 0, %s36
      %s40 = sphi 0, %s37
      %s56 = sphi 0, %s58
      %s59 = sphi 0, %s56
      %s60 = sphi 0, %s59
      %s76 = sphi 0, %s60
      %s84 = sphi 0, %s86
      %s87 = sphi 0, %s84
      %s88 = sphi 0, %s87
      %s104 = sphi 0, %s88
      %s112 = sphi 0, %s114
      %s115 = sphi 0, %s112
      %s116 = sphi 0, %s115
      %s132 = sphi 0, %s116
      %s140 = sphi 0, %s142
      %s143 = sphi 0, %s140
      %s144 = sphi 0, %s143
      %s160 = sphi 0, %s144
      %s170 = sphi 0, %s172
      %s173 = sphi 0, %s170
      %s174 = sphi 0, %s173
      %s190 = sphi 0, %s174
      %s200 = sphi 0, %s202
      %s203 = sphi 0, %s200
      %s204 = sphi 0, %s203
      %s220 = sphi 0, %s204
    $region4: #{tpu_custom_call.1} parent=1 // loop_header_branch
      %28 = sbr.rel (%p26) target = $region8
    $region5: #{tpu_custom_call.1} parent=1 // loop_body
      %s30 = ssub.s32 %s25, 1
      %s31 = ssub.s32 %s25, 2
      %s41 = sadd.s32 1, %s34
      %p42 = scmp.ge.s32.totalorder %s41, 2
      %s43 = scalar_select %p42, 0, %s41
      %s44 = sadd.s32 1, %s33
      %s45 = scalar_select %p42, %s44, %s33
      %p46 = scmp.ge.s32.totalorder %s45, 1
      %s47 = scalar_select %p46, 0, %s45
      %s48 = sadd.s32 1, %s32
      %s49 = scalar_select %p46, %s48, %s32
      %p50 = scmp.ge.s32.totalorder %s49, 1
      %s51 = scalar_select %p50, 0, %s49
      %s52 = ssub.s32 %s34, %s43
      %s53 = ssub.s32 %s32, %s51
      %s54 = sor.u32 %s52, %s53
      %p55 = scmp.eq.s32.totalorder %s54, 0
      %s57 = sadd.s32 %s56, 1
      %s58 = scalar_select %p55, %s56, %s57
      %p61 = pneg %p55
      %p62 = scmp.eq.s32.totalorder %s25, 1
      %p63 = por %p61, %p62
      %p64 = scmp.ne.s32.totalorder %s56, %s59
      %p65 = scmp.eq.s32.totalorder %s25, 0
      %p66 = por %p64, %p65
      %p67 = scmp.ne.s32.totalorder %s56, %s59
      %p68 = scmp.eq.s32.totalorder %s30, 1
      %p69 = por %p67, %p68
      %p70 = scmp.ne.s32.totalorder %s59, %s60
      %p71 = scmp.eq.s32.totalorder %s30, 0
      %p72 = por %p70, %p71
      %p73 = scmp.ne.s32.totalorder %s59, %s60
      %p74 = scmp.eq.s32.totalorder %s31, 1
      %p75 = por %p73, %p74
      %p77 = scmp.ne.s32.totalorder %s60, %s76
      %p78 = scmp.eq.s32.totalorder %s31, 0
      %p79 = por %p77, %p78
      %s80 = ssub.s32 %s34, %s43
      %s81 = ssub.s32 %s32, %s51
      %s82 = sor.u32 %s80, %s81
      %p83 = scmp.eq.s32.totalorder %s82, 0
      %s85 = sadd.s32 %s84, 1
      %s86 = scalar_select %p83, %s84, %s85
      %p89 = pneg %p83
      %p90 = scmp.eq.s32.totalorder %s25, 1
      %p91 = por %p89, %p90
      %p92 = scmp.ne.s32.totalorder %s84, %s87
      %p93 = scmp.eq.s32.totalorder %s25, 0
      %p94 = por %p92, %p93
      %p95 = scmp.ne.s32.totalorder %s84, %s87
      %p96 = scmp.eq.s32.totalorder %s30, 1
      %p97 = por %p95, %p96
      %p98 = scmp.ne.s32.totalorder %s87, %s88
      %p99 = scmp.eq.s32.totalorder %s30, 0
      %p100 = por %p98, %p99
      %p101 = scmp.ne.s32.totalorder %s87, %s88
      %p102 = scmp.eq.s32.totalorder %s31, 1
      %p103 = por %p101, %p102
      %p105 = scmp.ne.s32.totalorder %s88, %s104
      %p106 = scmp.eq.s32.totalorder %s31, 0
      %p107 = por %p105, %p106
      %s108 = ssub.s32 %s33, %s47
      %s109 = ssub.s32 %s32, %s51
      %s110 = sor.u32 %s108, %s109
      %p111 = scmp.eq.s32.totalorder %s110, 0
      %s113 = sadd.s32 %s112, 1
      %s114 = scalar_select %p111, %s112, %s113
      %p117 = pneg %p111
      %p118 = scmp.eq.s32.totalorder %s25, 1
      %p119 = por %p117, %p118
      %p120 = scmp.ne.s32.totalorder %s112, %s115
      %p121 = scmp.eq.s32.totalorder %s25, 0
      %p122 = por %p120, %p121
      %p123 = scmp.ne.s32.totalorder %s112, %s115
      %p124 = scmp.eq.s32.totalorder %s30, 1
      %p125 = por %p123, %p124
      %p126 = scmp.ne.s32.totalorder %s115, %s116
      %p127 = scmp.eq.s32.totalorder %s30, 0
      %p128 = por %p126, %p127
      %p129 = scmp.ne.s32.totalorder %s115, %s116
      %p130 = scmp.eq.s32.totalorder %s31, 1
      %p131 = por %p129, %p130
      %p133 = scmp.ne.s32.totalorder %s116, %s132
      %p134 = scmp.eq.s32.totalorder %s31, 0
      %p135 = por %p133, %p134
      %s136 = ssub.s32 %s33, %s47
      %s137 = ssub.s32 %s32, %s51
      %s138 = sor.u32 %s136, %s137
      %p139 = scmp.eq.s32.totalorder %s138, 0
      %s141 = sadd.s32 %s140, 1
      %s142 = scalar_select %p139, %s140, %s141
      %p145 = pneg %p139
      %p146 = scmp.eq.s32.totalorder %s25, 1
      %p147 = por %p145, %p146
      %p148 = scmp.ne.s32.totalorder %s140, %s143
      %p149 = scmp.eq.s32.totalorder %s25, 0
      %p150 = por %p148, %p149
      %p151 = scmp.ne.s32.totalorder %s140, %s143
      %p152 = scmp.eq.s32.totalorder %s30, 1
      %p153 = por %p151, %p152
      %p154 = scmp.ne.s32.totalorder %s143, %s144
      %p155 = scmp.eq.s32.totalorder %s30, 0
      %p156 = por %p154, %p155
      %p157 = scmp.ne.s32.totalorder %s143, %s144
      %p158 = scmp.eq.s32.totalorder %s31, 1
      %p159 = por %p157, %p158
      %p161 = scmp.ne.s32.totalorder %s144, %s160
      %p162 = scmp.eq.s32.totalorder %s31, 0
      %p163 = por %p161, %p162
      %s164 = ssub.s32 %s34, %s43
      %s165 = ssub.s32 %s33, %s47
      %s166 = sor.u32 %s164, %s165
      %s167 = ssub.s32 %s32, %s51
      %s168 = sor.u32 %s166, %s167
      %p169 = scmp.eq.s32.totalorder %s168, 0
      %s171 = sadd.s32 %s170, 1
      %s172 = scalar_select %p169, %s170, %s171
      %p175 = pneg %p169
      %p176 = scmp.eq.s32.totalorder %s25, 1
      %p177 = por %p175, %p176
      %p178 = scmp.ne.s32.totalorder %s170, %s173
      %p179 = scmp.eq.s32.totalorder %s25, 0
      %p180 = por %p178, %p179
      %p181 = scmp.ne.s32.totalorder %s170, %s173
      %p182 = scmp.eq.s32.totalorder %s30, 1
      %p183 = por %p181, %p182
      %p184 = scmp.ne.s32.totalorder %s173, %s174
      %p185 = scmp.eq.s32.totalorder %s30, 0
      %p186 = por %p184, %p185
      %p187 = scmp.ne.s32.totalorder %s173, %s174
      %p188 = scmp.eq.s32.totalorder %s31, 1
      %p189 = por %p187, %p188
      %p191 = scmp.ne.s32.totalorder %s174, %s190
      %p192 = scmp.eq.s32.totalorder %s31, 0
      %p193 = por %p191, %p192
      %s194 = ssub.s32 %s34, %s43
      %s195 = ssub.s32 %s33, %s47
      %s196 = sor.u32 %s194, %s195
      %s197 = ssub.s32 %s32, %s51
      %s198 = sor.u32 %s196, %s197
      %p199 = scmp.eq.s32.totalorder %s198, 0
      %s201 = sadd.s32 %s200, 1
      %s202 = scalar_select %p199, %s200, %s201
      %p205 = pneg %p199
      %p206 = scmp.eq.s32.totalorder %s25, 1
      %p207 = por %p205, %p206
      %p208 = scmp.ne.s32.totalorder %s200, %s203
      %p209 = scmp.eq.s32.totalorder %s25, 0
      %p210 = por %p208, %p209
      %p211 = scmp.ne.s32.totalorder %s200, %s203
      %p212 = scmp.eq.s32.totalorder %s30, 1
      %p213 = por %p211, %p212
      %p214 = scmp.ne.s32.totalorder %s203, %s204
      %p215 = scmp.eq.s32.totalorder %s30, 0
      %p216 = por %p214, %p215
      %p217 = scmp.ne.s32.totalorder %s203, %s204
      %p218 = scmp.eq.s32.totalorder %s31, 1
      %p219 = por %p217, %p218
      %p221 = scmp.ne.s32.totalorder %s204, %s220
      %p222 = scmp.eq.s32.totalorder %s31, 0
      %p223 = por %p221, %p222
      %p224 = scmp.le.s32.totalorder 1, %s25
      %p225 = scmp.lt.s32.totalorder %s25, 3
      %p226 = pnand %p224, %p225
      %p227 = pneg %p226
      // Predicated region
      $region9: #{tpu_custom_call.1} parent=5 // pred_check
        _
      $region10: #{tpu_custom_call.1} parent=5 // pred_check_branch
        %229 = sbr.rel (%p226) target = $region12
      $region11: #{tpu_custom_call.1} parent=5 // pred_region
        %s230 = ssub.s32 %s25, 1
        // Predicated region
        $region13: #{tpu_custom_call.1} parent=11 // pred_check
          %p231 = pneg %p128
        $region14: #{tpu_custom_call.1} parent=11 // pred_check_branch
          %233 = sbr.rel (%p231) target = $region16
        $region15: #{tpu_custom_call.1} parent=11 // pred_region
          %s235 = ssub.s32 512, 512
          %236 = vsyncadd [#allocation6], %s235
          %s237 = sadd.s32 %s35, %s36
          %s238 = smul.addr %s237, 128
          %s239 = scalar_lea.hbm %s2, %s238
          %s240 = sshll.u32 [#allocation7], 4
          %s241 = int_to_ptr.vmem [resolvable:$true] %s240
          %246 = dma.hbm_to_vmem [thread:$0]  %s239, 512, %s241, [#allocation6], 128, 128, 8
        $region16: #{tpu_custom_call.1} parent=11 // pred_fallthru
          _
        // Predicated region
        $region17: #{tpu_custom_call.1} parent=11 // pred_check
          %p247 = pneg %p156
        $region18: #{tpu_custom_call.1} parent=11 // pred_check_branch
          %249 = sbr.rel (%p247) target = $region20
        $region19: #{tpu_custom_call.1} parent=11 // pred_region
          %s251 = ssub.s32 512, 512
          %252 = vsyncadd [#allocation9], %s251
          %s253 = sadd.s32 %s35, %s36
          %s254 = smul.addr %s253, 128
          %s255 = scalar_lea.hbm %s3, %s254
          %s256 = sshll.u32 [#allocation8], 4
          %s257 = int_to_ptr.vmem [resolvable:$true] %s256
          %262 = dma.hbm_to_vmem [thread:$0]  %s255, 512, %s257, [#allocation9], 128, 128, 8
        $region20: #{tpu_custom_call.1} parent=11 // pred_fallthru
          _
      $region12: #{tpu_custom_call.1} parent=5 // pred_fallthru
        _
      %p263 = scmp.lt.s32.totalorder %s25, 2
      // Predicated region
      $region21: #{tpu_custom_call.1} parent=5 // pred_check
        %p264 = pneg %p263
      $region22: #{tpu_custom_call.1} parent=5 // pred_check_branch
        %266 = sbr.rel (%p264) target = $region24
      $region23: #{tpu_custom_call.1} parent=5 // pred_region
        // Predicated region
        $region25: #{tpu_custom_call.1} parent=23 // pred_check
          %p267 = pneg %p66
        $region26: #{tpu_custom_call.1} parent=23 // pred_check_branch
          %269 = sbr.rel (%p267) target = $region28
        $region27: #{tpu_custom_call.1} parent=23 // pred_region
          %s270 = sand.u32 %s56, 1
          %s271 = scalar_lea.sflag [#allocation3], %s270
          %s272 = sand.u32 %s56, 1
          %s273 = smul.addr %s272, 4
          %s274 = scalar_lea.vmem [#allocation2], %s273
          %s276 = ssub.s32 64, 64
          %277 = vsyncadd %s271, %s276
          %s278 = sadd.s32 %s32, %s34
          %s279 = smul.addr %s278, 64
          %s280 = scalar_lea.hbm %s0, %s279
          %s282 = sshll.u32 %s274, 4
          %s283 = int_to_ptr.vmem [resolvable:$true] %s282
          %285 = dma.hbm_to_vmem [thread:$0]  %s280, 64, %s283, %s271
        $region28: #{tpu_custom_call.1} parent=23 // pred_fallthru
          _
        // Predicated region
        $region29: #{tpu_custom_call.1} parent=23 // pred_check
          %p286 = pneg %p94
        $region30: #{tpu_custom_call.1} parent=23 // pred_check_branch
          %288 = sbr.rel (%p286) target = $region32
        $region31: #{tpu_custom_call.1} parent=23 // pred_region
          %s289 = sand.u32 %s25, 1
          %s290 = scalar_lea.sflag [#allocation6], %s289
          %s291 = sand.u32 %s84, 1
          %s292 = smul.addr %s291, 4
          %s293 = scalar_lea.vmem [#allocation5], %s292
          %s295 = ssub.s32 64, 64
          %296 = vsyncadd %s290, %s295
          %s297 = sadd.s32 %s32, %s34
          %s298 = smul.addr %s297, 64
          %s299 = scalar_lea.hbm %s1, %s298
          %s301 = sshll.u32 %s293, 4
          %s302 = int_to_ptr.vmem [resolvable:$true] %s301
          %304 = dma.hbm_to_vmem [thread:$0]  %s299, 64, %s302, %s290
        $region32: #{tpu_custom_call.1} parent=23 // pred_fallthru
          _
      $region24: #{tpu_custom_call.1} parent=5 // pred_fallthru
        _
      %p305 = scmp.le.s32.totalorder 1, %s25
      %p306 = scmp.lt.s32.totalorder %s25, 3
      %p307 = pnand %p305, %p306
      %p308 = pneg %p307
      // Predicated region
      $region33: #{tpu_custom_call.1} parent=5 // pred_check
        _
      $region34: #{tpu_custom_call.1} parent=5 // pred_check_branch
        %310 = sbr.rel (%p307) target = $region36
      $region35: #{tpu_custom_call.1} parent=5 // pred_region
        %s311 = ssub.s32 %s25, 1
        %s312 = sand.u32 %s59, 1
        %s313 = scalar_lea.sflag [#allocation3], %s312
        %s314 = sand.u32 %s59, 1
        %s315 = smul.addr %s314, 4
        %s316 = scalar_lea.vmem [#allocation2], %s315
        // Predicated region
        $region37: #{tpu_custom_call.1} parent=35 // pred_check
          %p317 = pneg %p72
        $region38: #{tpu_custom_call.1} parent=35 // pred_check_branch
          %319 = sbr.rel (%p317) target = $region40
        $region39: #{tpu_custom_call.1} parent=35 // pred_region
          %320 = dma.done %s313, 64
        $region40: #{tpu_custom_call.1} parent=35 // pred_fallthru
          _
        %s321 = sand.u32 %s30, 1
        %s322 = scalar_lea.sflag [#allocation6], %s321
        %s323 = sand.u32 %s87, 1
        %s324 = smul.addr %s323, 4
        %s325 = scalar_lea.vmem [#allocation5], %s324
        // Predicated region
        $region41: #{tpu_custom_call.1} parent=35 // pred_check
          %p326 = pneg %p100
        $region42: #{tpu_custom_call.1} parent=35 // pred_check_branch
          %328 = sbr.rel (%p326) target = $region44
        $region43: #{tpu_custom_call.1} parent=35 // pred_region
          %329 = dma.done %s322, 64
        $region44: #{tpu_custom_call.1} parent=35 // pred_fallthru
          _
        // Predicated region
        $region45: #{tpu_custom_call.1} parent=35 // pred_check
          %p330 = pneg %p128
        $region46: #{tpu_custom_call.1} parent=35 // pred_check_branch
          %332 = sbr.rel (%p330) target = $region48
        $region47: #{tpu_custom_call.1} parent=35 // pred_region
          %333 = dma.done [#allocation6], 512
        $region48: #{tpu_custom_call.1} parent=35 // pred_fallthru
          _
        // Predicated region
        $region49: #{tpu_custom_call.1} parent=35 // pred_check
          %p334 = pneg %p156
        $region50: #{tpu_custom_call.1} parent=35 // pred_check_branch
          %336 = sbr.rel (%p334) target = $region52
        $region51: #{tpu_custom_call.1} parent=35 // pred_region
          %337 = dma.done [#allocation9], 512
        $region52: #{tpu_custom_call.1} parent=35 // pred_fallthru
          _
        %s338 = sand.u32 %s59, 1
        %s339 = scalar_lea.sflag [#allocation3], %s338
        %s340 = sand.u32 %s59, 1
        %s341 = smul.addr %s340, 4
        %s342 = scalar_lea.vmem [#allocation2], %s341
        %p343 = pneg %p72
        %p344 = pneg %p69
        %s345 = sand.u32 %s30, 1
        %s346 = scalar_lea.sflag [#allocation6], %s345
        %s347 = sand.u32 %s87, 1
        %s348 = smul.addr %s347, 4
        %s349 = scalar_lea.vmem [#allocation5], %s348
        %p350 = pneg %p100
        %p351 = pneg %p97
        %p352 = pneg %p128
        %p353 = pneg %p125
        %p354 = pneg %p156
        %p355 = pneg %p153
        %p356 = pneg %p186
        %p357 = pneg %p183
        %s358 = sand.u32 %s173, 1
        %s359 = scalar_lea.sflag [#allocation4], %s358
        %s360 = sand.u32 %s173, 1
        %s361 = smul.addr %s360, 8
        %s362 = scalar_lea.vmem [#allocation10], %s361
        %p363 = pneg %p216
        %p364 = pneg %p213
        %s365 = sand.u32 %s203, 1
        %s366 = scalar_lea.sflag [#allocation12], %s365
        %s367 = sand.u32 %s203, 1
        %s368 = smul.addr %s367, 8
        %s369 = scalar_lea.vmem [#allocation11], %s368
        %v370 = vld [vmem:[%s316] sm:$0x1]
        %v371 = vld [vmem:[%s325] sm:$0x1]
        %v372 = vld [vmem:[#allocation7] sm:$0xff]
        %v373 = vld [vmem:[#allocation8] sm:$0xff]
        %v374 = vlaneseq
        %v375 = vshrl.u32 %v374, 7
        %v376 = vsub.s32 0, %v375
        %v377 = vrot.slane %v370, %v376
        %v378 = vmul.f32 %v377, %v372
        %v379 = vlaneseq
        %v380 = vshrl.u32 %v379, 7
        %v381 = vsub.s32 0, %v380
        %v382 = vrot.slane %v371, %v381
        %v383 = vmul.f32 %v382, %v373
        %v384 = vsub.f32 %v378, %v383
        %v385 = vadd.f32 %v384, 0.0
        %v386 = vmul.f32 %v377, %v373
        %v387 = vmul.f32 %v382, %v372
        %v388 = vadd.f32 %v386, %v387
        %v389 = vadd.f32 %v388, 0.0
        %v390 = vld [vmem:[%s316 + $0x1] sm:$0x1]
        %v391 = vld [vmem:[%s325 + $0x1] sm:$0x1]
        %s392 = scalar_lea.vmem [#allocation7], 8
        %v393 = vld [vmem:[%s392] sm:$0xff]
        %s394 = scalar_lea.vmem [#allocation8], 8
        %v395 = vld [vmem:[%s394] sm:$0xff]
        %v396 = vlaneseq
        %v397 = vshrl.u32 %v396, 7
        %v398 = vsub.s32 0, %v397
        %v399 = vrot.slane %v390, %v398
        %v400 = vmul.f32 %v399, %v393
        %v401 = vlaneseq
        %v402 = vshrl.u32 %v401, 7
        %v403 = vsub.s32 0, %v402
        %v404 = vrot.slane %v391, %v403
        %v405 = vmul.f32 %v404, %v395
        %v406 = vsub.f32 %v400, %v405
        %v407 = vadd.f32 %v385, %v406
        %v408 = vmul.f32 %v399, %v395
        %v409 = vmul.f32 %v404, %v393
        %v410 = vadd.f32 %v408, %v409
        %v411 = vadd.f32 %v389, %v410
        %v412 = vld [vmem:[%s316 + $0x2] sm:$0x1]
        %v413 = vld [vmem:[%s325 + $0x2] sm:$0x1]
        %s414 = scalar_lea.vmem [#allocation7], 16
        %v415 = vld [vmem:[%s414] sm:$0xff]
        %s416 = scalar_lea.vmem [#allocation8], 16
        %v417 = vld [vmem:[%s416] sm:$0xff]
        %v418 = vlaneseq
        %v419 = vshrl.u32 %v418, 7
        %v420 = vsub.s32 0, %v419
        %v421 = vrot.slane %v412, %v420
        %v422 = vmul.f32 %v421, %v415
        %v423 = vlaneseq
        %v424 = vshrl.u32 %v423, 7
        %v425 = vsub.s32 0, %v424
        %v426 = vrot.slane %v413, %v425
        %v427 = vmul.f32 %v426, %v417
        %v428 = vsub.f32 %v422, %v427
        %v429 = vadd.f32 %v407, %v428
        %v430 = vmul.f32 %v421, %v417
        %v431 = vmul.f32 %v426, %v415
        %v432 = vadd.f32 %v430, %v431
        %v433 = vadd.f32 %v411, %v432
        %v434 = vld [vmem:[%s316 + $0x3] sm:$0x1]
        %v435 = vld [vmem:[%s325 + $0x3] sm:$0x1]
        %s436 = scalar_lea.vmem [#allocation7], 24
        %v437 = vld [vmem:[%s436] sm:$0xff]
        %s438 = scalar_lea.vmem [#allocation8], 24
        %v439 = vld [vmem:[%s438] sm:$0xff]
        %v440 = vlaneseq
        %v441 = vshrl.u32 %v440, 7
        %v442 = vsub.s32 0, %v441
        %v443 = vrot.slane %v434, %v442
        %v444 = vmul.f32 %v443, %v437
        %v445 = vlaneseq
        %v446 = vshrl.u32 %v445, 7
        %v447 = vsub.s32 0, %v446
        %v448 = vrot.slane %v435, %v447
        %v449 = vmul.f32 %v448, %v439
        %v450 = vsub.f32 %v444, %v449
        %v451 = vadd.f32 %v429, %v450
        %v452 = vmul.f32 %v443, %v439
        %v453 = vmul.f32 %v448, %v437
        %v454 = vadd.f32 %v452, %v453
        %v455 = vadd.f32 %v433, %v454
        %456 = vst [vmem:[%s362] sm:$0xff] %v451
        %457 = vst [vmem:[%s369] sm:$0xff] %v455
        %s458 = sand.u32 %s173, 1
        %s459 = scalar_lea.sflag [#allocation4], %s458
        %s460 = sand.u32 %s173, 1
        %s461 = smul.addr %s460, 8
        %s462 = scalar_lea.vmem [#allocation10], %s461
        %s463 = sand.u32 %s203, 1
        %s464 = scalar_lea.sflag [#allocation12], %s463
        %s465 = sand.u32 %s203, 1
        %s466 = smul.addr %s465, 8
        %s467 = scalar_lea.vmem [#allocation11], %s466
        // Predicated region
        $region53: #{tpu_custom_call.1} parent=35 // pred_check
          %p468 = pneg %p183
        $region54: #{tpu_custom_call.1} parent=35 // pred_check_branch
          %470 = sbr.rel (%p468) target = $region56
        $region55: #{tpu_custom_call.1} parent=35 // pred_region
          %s472 = ssub.s32 128, 128
          %473 = vsyncadd %s459, %s472
          %s474 = sadd.s32 %s35, %s36
          %s475 = sadd.s32 %s474, %s37
          %s476 = smul.addr %s475, 128
          %s477 = scalar_lea.hbm %s4, %s476
          %s479 = sshll.u32 %s462, 4
          %s480 = int_to_ptr.vmem [resolvable:$true] %s479
          %482 = dma.vmem_to_hbm [thread:$0]  %s480, 128, %s477, %s459
        $region56: #{tpu_custom_call.1} parent=35 // pred_fallthru
          _
        // Predicated region
        $region57: #{tpu_custom_call.1} parent=35 // pred_check
          %p483 = pneg %p213
        $region58: #{tpu_custom_call.1} parent=35 // pred_check_branch
          %485 = sbr.rel (%p483) target = $region60
        $region59: #{tpu_custom_call.1} parent=35 // pred_region
          %s487 = ssub.s32 128, 128
          %488 = vsyncadd %s464, %s487
          %s489 = sadd.s32 %s35, %s36
          %s490 = sadd.s32 %s489, %s37
          %s491 = smul.addr %s490, 128
          %s492 = scalar_lea.hbm %s5, %s491
          %s494 = sshll.u32 %s467, 4
          %s495 = int_to_ptr.vmem [resolvable:$true] %s494
          %497 = dma.vmem_to_hbm [thread:$0]  %s495, 128, %s492, %s464
        $region60: #{tpu_custom_call.1} parent=35 // pred_fallthru
          _
      $region36: #{tpu_custom_call.1} parent=5 // pred_fallthru
        _
      %p498 = scmp.le.s32.totalorder 2, %s25
      // Predicated region
      $region61: #{tpu_custom_call.1} parent=5 // pred_check
        %p499 = pneg %p498
      $region62: #{tpu_custom_call.1} parent=5 // pred_check_branch
        %501 = sbr.rel (%p499) target = $region64
      $region63: #{tpu_custom_call.1} parent=5 // pred_region
        %s502 = ssub.s32 %s25, 2
        // Predicated region
        $region65: #{tpu_custom_call.1} parent=63 // pred_check
          %p503 = pneg %p189
        $region66: #{tpu_custom_call.1} parent=63 // pred_check_branch
          %505 = sbr.rel (%p503) target = $region68
        $region67: #{tpu_custom_call.1} parent=63 // pred_region
          %s506 = sand.u32 %s174, 1
          %s507 = scalar_lea.sflag [#allocation4], %s506
          %s508 = sand.u32 %s174, 1
          %s509 = smul.addr %s508, 8
          %s510 = scalar_lea.vmem [#allocation10], %s509
          %511 = dma.done %s507, 128
        $region68: #{tpu_custom_call.1} parent=63 // pred_fallthru
          _
        // Predicated region
        $region69: #{tpu_custom_call.1} parent=63 // pred_check
          %p512 = pneg %p219
        $region70: #{tpu_custom_call.1} parent=63 // pred_check_branch
          %514 = sbr.rel (%p512) target = $region72
        $region71: #{tpu_custom_call.1} parent=63 // pred_region
          %s515 = sand.u32 %s204, 1
          %s516 = scalar_lea.sflag [#allocation12], %s515
          %s517 = sand.u32 %s204, 1
          %s518 = smul.addr %s517, 8
          %s519 = scalar_lea.vmem [#allocation11], %s518
          %520 = dma.done %s516, 128
        $region72: #{tpu_custom_call.1} parent=63 // pred_fallthru
          _
      $region64: #{tpu_custom_call.1} parent=5 // pred_fallthru
        _
    $region6: #{tpu_custom_call.1} parent=1 // loop_footer
      %s29 = sadd.s32 1, %s25
    $region7: #{tpu_custom_call.1} parent=1 // loop_footer_branch
      %24 = sbr.rel target = $region3
    $region8: #{tpu_custom_call.1} parent=1 // loop_exit
      _
    %521 = vsyncpa [#allocation3], 1
    %s522 = scalar_lea.sflag [#allocation3], 1
    %523 = vsyncpa %s522, 1
    %524 = vsyncpa [#allocation6], 1
    %s525 = scalar_lea.sflag [#allocation6], 1
    %526 = vsyncpa %s525, 1
    %527 = vsyncpa [#allocation9], 1
    %528 = vsyncpa [#allocation4], 1
    %s529 = scalar_lea.sflag [#allocation4], 1
    %530 = vsyncpa %s529, 1
    %531 = vsyncpa [#allocation12], 1
    %s532 = scalar_lea.sflag [#allocation12], 1
    %533 = vsyncpa %s532, 1

// kernel: tpu_custom_call.1
$region0: #{tpu_custom_call.1}
  #allocation0 [shape = 'u32[]', space=smem, size = 0x4, offset = 0x4, fixed_abs, tag = 'smem constant byte address 0x4 - core index']
  #allocation1 [shape = 'u32[144,128]{1,0:T(1,128)}', space=vmem, size = 0x12000, scoped, tag = 'internal scratch']
  %s0 = inlined_call_operand.hbm [shape: f32[2,4,128], index: 0, kind: input, shape index: {}]
  %s1 = inlined_call_operand.hbm [shape: f32[2,4,128], index: 1, kind: input, shape index: {}]
  %s2 = inlined_call_operand.hbm [shape: f32[4,8,128], index: 2, kind: input, shape index: {}]
  %s3 = inlined_call_operand.hbm [shape: f32[4,8,128], index: 3, kind: input, shape index: {}]
  %s4 = inlined_call_operand.hbm [shape: f32[2,8,128], index: 4, kind: output, shape index: {0}]
  %s5 = inlined_call_operand.hbm [shape: f32[2,8,128], index: 5, kind: output, shape index: {1}]
  %6 = xla_tuple %s4, %s5
  %s7 = sld [smem:[#allocation0]]
  $region73: #{tpu_custom_call.1} parent=0
    _
  %s9 = ssub.s32 1, %s7
  %s10 = scalar_select 0, %s9, %s7
  $region1: #{tpu_custom_call.1} parent=0
    #allocation2 [shape = 'u8[4096]{0}', space=vmem, size = 0x1000, scoped, tag = 'input window, operand 0']
    #allocation3 [shape = 's32[2]{0}', space=sflag, size = 0x8, scoped, tag = 'scoped memory for tpu_custom_call.1']
    #allocation4 [shape = 's32[2]{0}', space=sflag, size = 0x8, scoped, tag = 'scoped memory for tpu_custom_call.1']
    #allocation5 [shape = 'u8[4096]{0}', space=vmem, size = 0x1000, scoped, tag = 'input window, operand 1']
    #allocation6 [shape = 's32[2]{0}', space=sflag, size = 0x8, scoped, tag = 'scoped memory for tpu_custom_call.1']
    #allocation7 [shape = 'u8[16384]{0}', space=vmem, size = 0x4000, scoped, tag = 'input window, operand 2, single buffered']
    #allocation8 [shape = 'u8[16384]{0}', space=vmem, size = 0x4000, scoped, tag = 'input window, operand 3, single buffered']
    #allocation9 [shape = 's32[1]{0}', space=sflag, size = 0x4, scoped, tag = 'scoped memory for tpu_custom_call.1']
    #allocation10 [shape = 'u8[8192]{0}', space=vmem, size = 0x2000, scoped, tag = 'output window, operand 0']
    #allocation11 [shape = 'u8[8192]{0}', space=vmem, size = 0x2000, scoped, tag = 'output window, operand 1']
    #allocation12 [shape = 's32[2]{0}', space=sflag, size = 0x8, scoped, tag = 'scoped memory for tpu_custom_call.1']
    %11 = vsyncpa [#allocation3], 0
    %s12 = scalar_lea.sflag [#allocation3], 1
    %13 = vsyncpa %s12, 0
    %14 = vsyncpa [#allocation6], 0
    %s15 = scalar_lea.sflag [#allocation6], 1
    %16 = vsyncpa %s15, 0
    %17 = vsyncpa [#allocation9], 0
    %18 = vsyncpa [#allocation4], 0
    %s19 = scalar_lea.sflag [#allocation4], 1
    %20 = vsyncpa %s19, 0
    %21 = vsyncpa [#allocation12], 0
    %s22 = scalar_lea.sflag [#allocation12], 1
    %23 = vsyncpa %s22, 0
    loop: start=0, step=1, limit=4
    $region2: #{tpu_custom_call.1} parent=1 // loop_pre_header
      _
    $region3: #{tpu_custom_call.1} parent=1 // loop_header
      %s25 = sphi 0, %s29
      %p26 = scmp.ge.s32.totalorder %s25, 4
      %s32 = sphi 0, %s51
      %s33 = sphi 0, %s47
      %s34 = sphi 0, %s43
      %s35 = sphi 0, %s32
      %s36 = sphi 0, %s33
      %s37 = sphi 0, %s34
      %s38 = sphi 0, %s35
      %s39 = sphi 0, %s36
      %s40 = sphi 0, %s37
      %s56 = sphi 0, %s58
      %s59 = sphi 0, %s56
      %s60 = sphi 0, %s59
      %s76 = sphi 0, %s60
      %s84 = sphi 0, %s86
      %s87 = sphi 0, %s84
      %s88 = sphi 0, %s87
      %s104 = sphi 0, %s88
      %s112 = sphi 0, %s114
      %s115 = sphi 0, %s112
      %s116 = sphi 0, %s115
      %s132 = sphi 0, %s116
      %s140 = sphi 0, %s142
      %s143 = sphi 0, %s140
      %s144 = sphi 0, %s143
      %s160 = sphi 0, %s144
      %s170 = sphi 0, %s172
      %s173 = sphi 0, %s170
      %s174 = sphi 0, %s173
      %s190 = sphi 0, %s174
      %s200 = sphi 0, %s202
      %s203 = sphi 0, %s200
      %s204 = sphi 0, %s203
      %s220 = sphi 0, %s204
    $region4: #{tpu_custom_call.1} parent=1 // loop_header_branch
      %28 = sbr.rel (%p26) target = $region8
    $region5: #{tpu_custom_call.1} parent=1 // loop_body
      %s30 = ssub.s32 %s25, 1
      %s31 = ssub.s32 %s25, 2
      %s41 = sadd.s32 1, %s34
      %p42 = scmp.ge.s32.totalorder %s41, 2
      %s43 = scalar_select %p42, 0, %s41
      %s44 = sadd.s32 1, %s33
      %s45 = scalar_select %p42, %s44, %s33
      %p46 = scmp.ge.s32.totalorder %s45, 1
      %s47 = scalar_select %p46, 0, %s45
      %s48 = sadd.s32 1, %s32
      %s49 = scalar_select %p46, %s48, %s32
      %p50 = scmp.ge.s32.totalorder %s49, 1
      %s51 = scalar_select %p50, 0, %s49
      %s52 = ssub.s32 %s34, %s43
      %s53 = ssub.s32 %s32, %s51
      %s54 = sor.u32 %s52, %s53
      %p55 = scmp.eq.s32.totalorder %s54, 0
      %s57 = sadd.s32 %s56, 1
      %s58 = scalar_select %p55, %s56, %s57
      %p61 = pneg %p55
      %p62 = scmp.eq.s32.totalorder %s25, 1
      %p63 = por %p61, %p62
      %p64 = scmp.ne.s32.totalorder %s56, %s59
      %p65 = scmp.eq.s32.totalorder %s25, 0
      %p66 = por %p64, %p65
      %p67 = scmp.ne.s32.totalorder %s56, %s59
      %p68 = scmp.eq.s32.totalorder %s30, 1
      %p69 = por %p67, %p68
      %p70 = scmp.ne.s32.totalorder %s59, %s60
      %p71 = scmp.eq.s32.totalorder %s30, 0
      %p72 = por %p70, %p71
      %p73 = scmp.ne.s32.totalorder %s59, %s60
      %p74 = scmp.eq.s32.totalorder %s31, 1
      %p75 = por %p73, %p74
      %p77 = scmp.ne.s32.totalorder %s60, %s76
      %p78 = scmp.eq.s32.totalorder %s31, 0
      %p79 = por %p77, %p78
      %s80 = ssub.s32 %s34, %s43
      %s81 = ssub.s32 %s32, %s51
      %s82 = sor.u32 %s80, %s81
      %p83 = scmp.eq.s32.totalorder %s82, 0
      %s85 = sadd.s32 %s84, 1
      %s86 = scalar_select %p83, %s84, %s85
      %p89 = pneg %p83
      %p90 = scmp.eq.s32.totalorder %s25, 1
      %p91 = por %p89, %p90
      %p92 = scmp.ne.s32.totalorder %s84, %s87
      %p93 = scmp.eq.s32.totalorder %s25, 0
      %p94 = por %p92, %p93
      %p95 = scmp.ne.s32.totalorder %s84, %s87
      %p96 = scmp.eq.s32.totalorder %s30, 1
      %p97 = por %p95, %p96
      %p98 = scmp.ne.s32.totalorder %s87, %s88
      %p99 = scmp.eq.s32.totalorder %s30, 0
      %p100 = por %p98, %p99
      %p101 = scmp.ne.s32.totalorder %s87, %s88
      %p102 = scmp.eq.s32.totalorder %s31, 1
      %p103 = por %p101, %p102
      %p105 = scmp.ne.s32.totalorder %s88, %s104
      %p106 = scmp.eq.s32.totalorder %s31, 0
      %p107 = por %p105, %p106
      %s108 = ssub.s32 %s33, %s47
      %s109 = ssub.s32 %s32, %s51
      %s110 = sor.u32 %s108, %s109
      %p111 = scmp.eq.s32.totalorder %s110, 0
      %s113 = sadd.s32 %s112, 1
      %s114 = scalar_select %p111, %s112, %s113
      %p117 = pneg %p111
      %p118 = scmp.eq.s32.totalorder %s25, 1
      %p119 = por %p117, %p118
      %p120 = scmp.ne.s32.totalorder %s112, %s115
      %p121 = scmp.eq.s32.totalorder %s25, 0
      %p122 = por %p120, %p121
      %p123 = scmp.ne.s32.totalorder %s112, %s115
      %p124 = scmp.eq.s32.totalorder %s30, 1
      %p125 = por %p123, %p124
      %p126 = scmp.ne.s32.totalorder %s115, %s116
      %p127 = scmp.eq.s32.totalorder %s30, 0
      %p128 = por %p126, %p127
      %p129 = scmp.ne.s32.totalorder %s115, %s116
      %p130 = scmp.eq.s32.totalorder %s31, 1
      %p131 = por %p129, %p130
      %p133 = scmp.ne.s32.totalorder %s116, %s132
      %p134 = scmp.eq.s32.totalorder %s31, 0
      %p135 = por %p133, %p134
      %s136 = ssub.s32 %s33, %s47
      %s137 = ssub.s32 %s32, %s51
      %s138 = sor.u32 %s136, %s137
      %p139 = scmp.eq.s32.totalorder %s138, 0
      %s141 = sadd.s32 %s140, 1
      %s142 = scalar_select %p139, %s140, %s141
      %p145 = pneg %p139
      %p146 = scmp.eq.s32.totalorder %s25, 1
      %p147 = por %p145, %p146
      %p148 = scmp.ne.s32.totalorder %s140, %s143
      %p149 = scmp.eq.s32.totalorder %s25, 0
      %p150 = por %p148, %p149
      %p151 = scmp.ne.s32.totalorder %s140, %s143
      %p152 = scmp.eq.s32.totalorder %s30, 1
      %p153 = por %p151, %p152
      %p154 = scmp.ne.s32.totalorder %s143, %s144
      %p155 = scmp.eq.s32.totalorder %s30, 0
      %p156 = por %p154, %p155
      %p157 = scmp.ne.s32.totalorder %s143, %s144
      %p158 = scmp.eq.s32.totalorder %s31, 1
      %p159 = por %p157, %p158
      %p161 = scmp.ne.s32.totalorder %s144, %s160
      %p162 = scmp.eq.s32.totalorder %s31, 0
      %p163 = por %p161, %p162
      %s164 = ssub.s32 %s34, %s43
      %s165 = ssub.s32 %s33, %s47
      %s166 = sor.u32 %s164, %s165
      %s167 = ssub.s32 %s32, %s51
      %s168 = sor.u32 %s166, %s167
      %p169 = scmp.eq.s32.totalorder %s168, 0
      %s171 = sadd.s32 %s170, 1
      %s172 = scalar_select %p169, %s170, %s171
      %p175 = pneg %p169
      %p176 = scmp.eq.s32.totalorder %s25, 1
      %p177 = por %p175, %p176
      %p178 = scmp.ne.s32.totalorder %s170, %s173
      %p179 = scmp.eq.s32.totalorder %s25, 0
      %p180 = por %p178, %p179
      %p181 = scmp.ne.s32.totalorder %s170, %s173
      %p182 = scmp.eq.s32.totalorder %s30, 1
      %p183 = por %p181, %p182
      %p184 = scmp.ne.s32.totalorder %s173, %s174
      %p185 = scmp.eq.s32.totalorder %s30, 0
      %p186 = por %p184, %p185
      %p187 = scmp.ne.s32.totalorder %s173, %s174
      %p188 = scmp.eq.s32.totalorder %s31, 1
      %p189 = por %p187, %p188
      %p191 = scmp.ne.s32.totalorder %s174, %s190
      %p192 = scmp.eq.s32.totalorder %s31, 0
      %p193 = por %p191, %p192
      %s194 = ssub.s32 %s34, %s43
      %s195 = ssub.s32 %s33, %s47
      %s196 = sor.u32 %s194, %s195
      %s197 = ssub.s32 %s32, %s51
      %s198 = sor.u32 %s196, %s197
      %p199 = scmp.eq.s32.totalorder %s198, 0
      %s201 = sadd.s32 %s200, 1
      %s202 = scalar_select %p199, %s200, %s201
      %p205 = pneg %p199
      %p206 = scmp.eq.s32.totalorder %s25, 1
      %p207 = por %p205, %p206
      %p208 = scmp.ne.s32.totalorder %s200, %s203
      %p209 = scmp.eq.s32.totalorder %s25, 0
      %p210 = por %p208, %p209
      %p211 = scmp.ne.s32.totalorder %s200, %s203
      %p212 = scmp.eq.s32.totalorder %s30, 1
      %p213 = por %p211, %p212
      %p214 = scmp.ne.s32.totalorder %s203, %s204
      %p215 = scmp.eq.s32.totalorder %s30, 0
      %p216 = por %p214, %p215
      %p217 = scmp.ne.s32.totalorder %s203, %s204
      %p218 = scmp.eq.s32.totalorder %s31, 1
      %p219 = por %p217, %p218
      %p221 = scmp.ne.s32.totalorder %s204, %s220
      %p222 = scmp.eq.s32.totalorder %s31, 0
      %p223 = por %p221, %p222
      %p224 = scmp.le.s32.totalorder 1, %s25
      %p225 = scmp.lt.s32.totalorder %s25, 3
      %p226 = pnand %p224, %p225
      %p227 = pneg %p226
      // Predicated region
      $region9: #{tpu_custom_call.1} parent=5 // pred_check
        _
      $region10: #{tpu_custom_call.1} parent=5 // pred_check_branch
        %229 = sbr.rel (%p226) target = $region12
      $region11: #{tpu_custom_call.1} parent=5 // pred_region
        %s230 = ssub.s32 %s25, 1
        // Predicated region
        $region13: #{tpu_custom_call.1} parent=11 // pred_check
          %p231 = pneg %p128
        $region14: #{tpu_custom_call.1} parent=11 // pred_check_branch
          %233 = sbr.rel (%p231) target = $region16
        $region15: #{tpu_custom_call.1} parent=11 // pred_region
          %s235 = ssub.s32 512, 512
          %236 = vsyncadd [#allocation6], %s235
          %s237 = sadd.s32 %s35, %s36
          %s238 = smul.addr %s237, 128
          %s239 = scalar_lea.hbm %s2, %s238
          %s240 = sshll.u32 [#allocation7], 4
          %s241 = int_to_ptr.vmem [resolvable:$true] %s240
          %246 = dma.hbm_to_vmem [thread:$0]  %s239, 512, %s241, [#allocation6], 128, 128, 8
        $region16: #{tpu_custom_call.1} parent=11 // pred_fallthru
          _
        // Predicated region
        $region17: #{tpu_custom_call.1} parent=11 // pred_check
          %p247 = pneg %p156
        $region18: #{tpu_custom_call.1} parent=11 // pred_check_branch
          %249 = sbr.rel (%p247) target = $region20
        $region19: #{tpu_custom_call.1} parent=11 // pred_region
          %s251 = ssub.s32 512, 512
          %252 = vsyncadd [#allocation9], %s251
          %s253 = sadd.s32 %s35, %s36
          %s254 = smul.addr %s253, 128
          %s255 = scalar_lea.hbm %s3, %s254
          %s256 = sshll.u32 [#allocation8], 4
          %s257 = int_to_ptr.vmem [resolvable:$true] %s256
          %262 = dma.hbm_to_vmem [thread:$0]  %s255, 512, %s257, [#allocation9], 128, 128, 8
        $region20: #{tpu_custom_call.1} parent=11 // pred_fallthru
          _
      $region12: #{tpu_custom_call.1} parent=5 // pred_fallthru
        _
      %p263 = scmp.lt.s32.totalorder %s25, 2
      // Predicated region
      $region21: #{tpu_custom_call.1} parent=5 // pred_check
        %p264 = pneg %p263
      $region22: #{tpu_custom_call.1} parent=5 // pred_check_branch
        %266 = sbr.rel (%p264) target = $region24
      $region23: #{tpu_custom_call.1} parent=5 // pred_region
        // Predicated region
        $region25: #{tpu_custom_call.1} parent=23 // pred_check
          %p267 = pneg %p66
        $region26: #{tpu_custom_call.1} parent=23 // pred_check_branch
          %269 = sbr.rel (%p267) target = $region28
        $region27: #{tpu_custom_call.1} parent=23 // pred_region
          %s270 = sand.u32 %s56, 1
          %s271 = scalar_lea.sflag [#allocation3], %s270
          %s272 = sand.u32 %s56, 1
          %s273 = smul.addr %s272, 4
          %s274 = scalar_lea.vmem [#allocation2], %s273
          %s276 = ssub.s32 64, 64
          %277 = vsyncadd %s271, %s276
          %s278 = sadd.s32 %s32, %s34
          %s279 = smul.addr %s278, 64
          %s280 = scalar_lea.hbm %s0, %s279
          %s282 = sshll.u32 %s274, 4
          %s283 = int_to_ptr.vmem [resolvable:$true] %s282
          %285 = dma.hbm_to_vmem [thread:$0]  %s280, 64, %s283, %s271
        $region28: #{tpu_custom_call.1} parent=23 // pred_fallthru
          _
        // Predicated region
        $region29: #{tpu_custom_call.1} parent=23 // pred_check
          %p286 = pneg %p94
        $region30: #{tpu_custom_call.1} parent=23 // pred_check_branch
          %288 = sbr.rel (%p286) target = $region32
        $region31: #{tpu_custom_call.1} parent=23 // pred_region
          %s289 = sand.u32 %s25, 1
          %s290 = scalar_lea.sflag [#allocation6], %s289
          %s291 = sand.u32 %s84, 1
          %s292 = smul.addr %s291, 4
          %s293 = scalar_lea.vmem [#allocation5], %s292
          %s295 = ssub.s32 64, 64
          %296 = vsyncadd %s290, %s295
          %s297 = sadd.s32 %s32, %s34
          %s298 = smul.addr %s297, 64
          %s299 = scalar_lea.hbm %s1, %s298
          %s301 = sshll.u32 %s293, 4
          %s302 = int_to_ptr.vmem [resolvable:$true] %s301
          %304 = dma.hbm_to_vmem [thread:$0]  %s299, 64, %s302, %s290
        $region32: #{tpu_custom_call.1} parent=23 // pred_fallthru
          _
      $region24: #{tpu_custom_call.1} parent=5 // pred_fallthru
        _
      %p305 = scmp.le.s32.totalorder 1, %s25
      %p306 = scmp.lt.s32.totalorder %s25, 3
      %p307 = pnand %p305, %p306
      %p308 = pneg %p307
      // Predicated region
      $region33: #{tpu_custom_call.1} parent=5 // pred_check
        _
      $region34: #{tpu_custom_call.1} parent=5 // pred_check_branch
        %310 = sbr.rel (%p307) target = $region36
      $region35: #{tpu_custom_call.1} parent=5 // pred_region
        %s311 = ssub.s32 %s25, 1
        %s312 = sand.u32 %s59, 1
        %s313 = scalar_lea.sflag [#allocation3], %s312
        %s314 = sand.u32 %s59, 1
        %s315 = smul.addr %s314, 4
        %s316 = scalar_lea.vmem [#allocation2], %s315
        // Predicated region
        $region37: #{tpu_custom_call.1} parent=35 // pred_check
          %p317 = pneg %p72
        $region38: #{tpu_custom_call.1} parent=35 // pred_check_branch
          %319 = sbr.rel (%p317) target = $region40
        $region39: #{tpu_custom_call.1} parent=35 // pred_region
          %320 = dma.done %s313, 64
        $region40: #{tpu_custom_call.1} parent=35 // pred_fallthru
          _
        %s321 = sand.u32 %s30, 1
        %s322 = scalar_lea.sflag [#allocation6], %s321
        %s323 = sand.u32 %s87, 1
        %s324 = smul.addr %s323, 4
        %s325 = scalar_lea.vmem [#allocation5], %s324
        // Predicated region
        $region41: #{tpu_custom_call.1} parent=35 // pred_check
          %p326 = pneg %p100
        $region42: #{tpu_custom_call.1} parent=35 // pred_check_branch
          %328 = sbr.rel (%p326) target = $region44
        $region43: #{tpu_custom_call.1} parent=35 // pred_region
          %329 = dma.done %s322, 64
        $region44: #{tpu_custom_call.1} parent=35 // pred_fallthru
          _
        // Predicated region
        $region45: #{tpu_custom_call.1} parent=35 // pred_check
          %p330 = pneg %p128
        $region46: #{tpu_custom_call.1} parent=35 // pred_check_branch
          %332 = sbr.rel (%p330) target = $region48
        $region47: #{tpu_custom_call.1} parent=35 // pred_region
          %333 = dma.done [#allocation6], 512
        $region48: #{tpu_custom_call.1} parent=35 // pred_fallthru
          _
        // Predicated region
        $region49: #{tpu_custom_call.1} parent=35 // pred_check
          %p334 = pneg %p156
        $region50: #{tpu_custom_call.1} parent=35 // pred_check_branch
          %336 = sbr.rel (%p334) target = $region52
        $region51: #{tpu_custom_call.1} parent=35 // pred_region
          %337 = dma.done [#allocation9], 512
        $region52: #{tpu_custom_call.1} parent=35 // pred_fallthru
          _
        %s338 = sand.u32 %s59, 1
        %s339 = scalar_lea.sflag [#allocation3], %s338
        %s340 = sand.u32 %s59, 1
        %s341 = smul.addr %s340, 4
        %s342 = scalar_lea.vmem [#allocation2], %s341
        %p343 = pneg %p72
        %p344 = pneg %p69
        %s345 = sand.u32 %s30, 1
        %s346 = scalar_lea.sflag [#allocation6], %s345
        %s347 = sand.u32 %s87, 1
        %s348 = smul.addr %s347, 4
        %s349 = scalar_lea.vmem [#allocation5], %s348
        %p350 = pneg %p100
        %p351 = pneg %p97
        %p352 = pneg %p128
        %p353 = pneg %p125
        %p354 = pneg %p156
        %p355 = pneg %p153
        %p356 = pneg %p186
        %p357 = pneg %p183
        %s358 = sand.u32 %s173, 1
        %s359 = scalar_lea.sflag [#allocation4], %s358
        %s360 = sand.u32 %s173, 1
        %s361 = smul.addr %s360, 8
        %s362 = scalar_lea.vmem [#allocation10], %s361
        %p363 = pneg %p216
        %p364 = pneg %p213
        %s365 = sand.u32 %s203, 1
        %s366 = scalar_lea.sflag [#allocation12], %s365
        %s367 = sand.u32 %s203, 1
        %s368 = smul.addr %s367, 8
        %s369 = scalar_lea.vmem [#allocation11], %s368
        %v370 = vld [vmem:[%s316] sm:$0x1]
        %v371 = vld [vmem:[%s325] sm:$0x1]
        %v372 = vld [vmem:[#allocation7] sm:$0xff]
        %v373 = vld [vmem:[#allocation8] sm:$0xff]
        %v374 = vlaneseq
        %v375 = vshrl.u32 %v374, 7
        %v376 = vsub.s32 0, %v375
        %v377 = vrot.slane %v370, %v376
        %v378 = vmul.f32 %v377, %v372
        %v379 = vlaneseq
        %v380 = vshrl.u32 %v379, 7
        %v381 = vsub.s32 0, %v380
        %v382 = vrot.slane %v371, %v381
        %v383 = vmul.f32 %v382, %v373
        %v384 = vsub.f32 %v378, %v383
        %v385 = vadd.f32 %v384, 0.0
        %v386 = vmul.f32 %v377, %v373
        %v387 = vmul.f32 %v382, %v372
        %v388 = vadd.f32 %v386, %v387
        %v389 = vadd.f32 %v388, 0.0
        %v390 = vld [vmem:[%s316 + $0x1] sm:$0x1]
        %v391 = vld [vmem:[%s325 + $0x1] sm:$0x1]
        %s392 = scalar_lea.vmem [#allocation7], 8
        %v393 = vld [vmem:[%s392] sm:$0xff]
        %s394 = scalar_lea.vmem [#allocation8], 8
        %v395 = vld [vmem:[%s394] sm:$0xff]
        %v396 = vlaneseq
        %v397 = vshrl.u32 %v396, 7
        %v398 = vsub.s32 0, %v397
        %v399 = vrot.slane %v390, %v398
        %v400 = vmul.f32 %v399, %v393
        %v401 = vlaneseq
        %v402 = vshrl.u32 %v401, 7
        %v403 = vsub.s32 0, %v402
        %v404 = vrot.slane %v391, %v403
        %v405 = vmul.f32 %v404, %v395
        %v406 = vsub.f32 %v400, %v405
        %v407 = vadd.f32 %v385, %v406
        %v408 = vmul.f32 %v399, %v395
        %v409 = vmul.f32 %v404, %v393
        %v410 = vadd.f32 %v408, %v409
        %v411 = vadd.f32 %v389, %v410
        %v412 = vld [vmem:[%s316 + $0x2] sm:$0x1]
        %v413 = vld [vmem:[%s325 + $0x2] sm:$0x1]
        %s414 = scalar_lea.vmem [#allocation7], 16
        %v415 = vld [vmem:[%s414] sm:$0xff]
        %s416 = scalar_lea.vmem [#allocation8], 16
        %v417 = vld [vmem:[%s416] sm:$0xff]
        %v418 = vlaneseq
        %v419 = vshrl.u32 %v418, 7
        %v420 = vsub.s32 0, %v419
        %v421 = vrot.slane %v412, %v420
        %v422 = vmul.f32 %v421, %v415
        %v423 = vlaneseq
        %v424 = vshrl.u32 %v423, 7
        %v425 = vsub.s32 0, %v424
        %v426 = vrot.slane %v413, %v425
        %v427 = vmul.f32 %v426, %v417
        %v428 = vsub.f32 %v422, %v427
        %v429 = vadd.f32 %v407, %v428
        %v430 = vmul.f32 %v421, %v417
        %v431 = vmul.f32 %v426, %v415
        %v432 = vadd.f32 %v430, %v431
        %v433 = vadd.f32 %v411, %v432
        %v434 = vld [vmem:[%s316 + $0x3] sm:$0x1]
        %v435 = vld [vmem:[%s325 + $0x3] sm:$0x1]
        %s436 = scalar_lea.vmem [#allocation7], 24
        %v437 = vld [vmem:[%s436] sm:$0xff]
        %s438 = scalar_lea.vmem [#allocation8], 24
        %v439 = vld [vmem:[%s438] sm:$0xff]
        %v440 = vlaneseq
        %v441 = vshrl.u32 %v440, 7
        %v442 = vsub.s32 0, %v441
        %v443 = vrot.slane %v434, %v442
        %v444 = vmul.f32 %v443, %v437
        %v445 = vlaneseq
        %v446 = vshrl.u32 %v445, 7
        %v447 = vsub.s32 0, %v446
        %v448 = vrot.slane %v435, %v447
        %v449 = vmul.f32 %v448, %v439
        %v450 = vsub.f32 %v444, %v449
        %v451 = vadd.f32 %v429, %v450
        %v452 = vmul.f32 %v443, %v439
        %v453 = vmul.f32 %v448, %v437
        %v454 = vadd.f32 %v452, %v453
        %v455 = vadd.f32 %v433, %v454
        %456 = vst [vmem:[%s362] sm:$0xff] %v451
        %457 = vst [vmem:[%s369] sm:$0xff] %v455
        %s458 = sand.u32 %s173, 1
        %s459 = scalar_lea.sflag [#allocation4], %s458
        %s460 = sand.u32 %s173, 1
        %s461 = smul.addr %s460, 8
        %s462 = scalar_lea.vmem [#allocation10], %s461
        %s463 = sand.u32 %s203, 1
        %s464 = scalar_lea.sflag [#allocation12], %s463
        %s465 = sand.u32 %s203, 1
        %s466 = smul.addr %s465, 8
        %s467 = scalar_lea.vmem [#allocation11], %s466
        // Predicated region
        $region53: #{tpu_custom_call.1} parent=35 // pred_check
          %p468 = pneg %p183
        $region54: #{tpu_custom_call.1} parent=35 // pred_check_branch
          %470 = sbr.rel (%p468) target = $region56
        $region55: #{tpu_custom_call.1} parent=35 // pred_region
          %s472 = ssub.s32 128, 128
          %473 = vsyncadd %s459, %s472
          %s474 = sadd.s32 %s35, %s36
          %s475 = sadd.s32 %s474, %s37
          %s476 = smul.addr %s475, 128
          %s477 = scalar_lea.hbm %s4, %s476
          %s479 = sshll.u32 %s462, 4
          %s480 = int_to_ptr.vmem [resolvable:$true] %s479
          %482 = dma.vmem_to_hbm [thread:$0]  %s480, 128, %s477, %s459
        $region56: #{tpu_custom_call.1} parent=35 // pred_fallthru
          _
        // Predicated region
        $region57: #{tpu_custom_call.1} parent=35 // pred_check
          %p483 = pneg %p213
        $region58: #{tpu_custom_call.1} parent=35 // pred_check_branch
          %485 = sbr.rel (%p483) target = $region60
        $region59: #{tpu_custom_call.1} parent=35 // pred_region
          %s487 = ssub.s32 128, 128
          %488 = vsyncadd %s464, %s487
          %s489 = sadd.s32 %s35, %s36
          %s490 = sadd.s32 %s489, %s37
          %s491 = smul.addr %s490, 128
          %s492 = scalar_lea.hbm %s5, %s491
          %s494 = sshll.u32 %s467, 4
          %s495 = int_to_ptr.vmem [resolvable:$true] %s494
          %497 = dma.vmem_to_hbm [thread:$0]  %s495, 128, %s492, %s464
        $region60: #{tpu_custom_call.1} parent=35 // pred_fallthru
          _
      $region36: #{tpu_custom_call.1} parent=5 // pred_fallthru
        _
      %p498 = scmp.le.s32.totalorder 2, %s25
      // Predicated region
      $region61: #{tpu_custom_call.1} parent=5 // pred_check
        %p499 = pneg %p498
      $region62: #{tpu_custom_call.1} parent=5 // pred_check_branch
        %501 = sbr.rel (%p499) target = $region64
      $region63: #{tpu_custom_call.1} parent=5 // pred_region
        %s502 = ssub.s32 %s25, 2
        // Predicated region
        $region65: #{tpu_custom_call.1} parent=63 // pred_check
          %p503 = pneg %p189
        $region66: #{tpu_custom_call.1} parent=63 // pred_check_branch
          %505 = sbr.rel (%p503) target = $region68
        $region67: #{tpu_custom_call.1} parent=63 // pred_region
          %s506 = sand.u32 %s174, 1
          %s507 = scalar_lea.sflag [#allocation4], %s506
          %s508 = sand.u32 %s174, 1
          %s509 = smul.addr %s508, 8
          %s510 = scalar_lea.vmem [#allocation10], %s509
          %511 = dma.done %s507, 128
        $region68: #{tpu_custom_call.1} parent=63 // pred_fallthru
          _
        // Predicated region
        $region69: #{tpu_custom_call.1} parent=63 // pred_check
          %p512 = pneg %p219
        $region70: #{tpu_custom_call.1} parent=63 // pred_check_branch
          %514 = sbr.rel (%p512) target = $region72
        $region71: #{tpu_custom_call.1} parent=63 // pred_region
          %s515 = sand.u32 %s204, 1
          %s516 = scalar_lea.sflag [#allocation12], %s515
          %s517 = sand.u32 %s204, 1
          %s518 = smul.addr %s517, 8
          %s519 = scalar_lea.vmem [#allocation11], %s518
          %520 = dma.done %s516, 128
        $region72: #{tpu_custom_call.1} parent=63 // pred_fallthru
          _
      $region64: #{tpu_custom_call.1} parent=5 // pred_fallthru
        _
    $region6: #{tpu_custom_call.1} parent=1 // loop_footer
      %s29 = sadd.s32 1, %s25
    $region7: #{tpu_custom_call.1} parent=1 // loop_footer_branch
      %24 = sbr.rel target = $region3
    $region8: #{tpu_custom_call.1} parent=1 // loop_exit
      _
    %521 = vsyncpa [#allocation3], 1
    %s522 = scalar_lea.sflag [#allocation3], 1
    %523 = vsyncpa %s522, 1
    %524 = vsyncpa [#allocation6], 1
    %s525 = scalar_lea.sflag [#allocation6], 1
    %526 = vsyncpa %s525, 1
    %527 = vsyncpa [#allocation9], 1
    %528 = vsyncpa [#allocation4], 1
    %s529 = scalar_lea.sflag [#allocation4], 1
    %530 = vsyncpa %s529, 1
    %531 = vsyncpa [#allocation12], 1
    %s532 = scalar_lea.sflag [#allocation12], 1
    %533 = vsyncpa %s532, 1

</llo_original>
